<compile_context>
chip_gen: v5e
topology: v5e:2x2
jax: 0.10.0
libtpu: 0.0.40
codegen_flags: <defaults>
</compile_context>

<pallas_src>
import functools

import jax
import jax.numpy as jnp
from jax import lax
from jax.experimental import pallas as pl
from jax.experimental.pallas import tpu as pltpu


def _res_correction_kernel(x_ref, y_ref, x_rows_ref, y_rows_ref,
                           w_red_ref, b_red_ref,
                           w_rc_ref, b_rc_ref,
                           w_up_ref, b_up_ref,
                           w_out_ref, b_out_ref,
                           o_ref,
                           xt_buf, xb_buf, yt_buf, yb_buf, dma_sems):
    n = pl.program_id(0)
    hb = pl.program_id(1)
    nhb = pl.num_programs(1)

    _, TH, W, Cin = x_ref.shape
    Cinp, Crp = w_red_ref.shape
    Cout = o_ref.shape[3]
    H = nhb * TH
    f32 = jnp.float32
    mxu = w_red_ref.dtype          # bf16 when the bf16-MXU path is requested

    # ---- kick off halo-row DMAs (one row above / below this block) --------
    # Rows are clamped into the image so the DMA is always valid; the results
    # are masked to zero below when the true halo row lies outside the image.
    row0 = hb * TH
    top_row = n * H + jnp.maximum(row0 - 1, 0)
    bot_row = n * H + jnp.minimum(row0 + TH, H - 1)
    copies = (
        pltpu.make_async_copy(x_rows_ref.at[top_row], xt_buf, dma_sems.at[0]),
        pltpu.make_async_copy(y_rows_ref.at[top_row], yt_buf, dma_sems.at[1]),
        pltpu.make_async_copy(x_rows_ref.at[bot_row], xb_buf, dma_sems.at[2]),
        pltpu.make_async_copy(y_rows_ref.at[bot_row], yb_buf, dma_sems.at[3]),
    )
    for cp in copies:
        cp.start()

    def pad_lanes(a):
        """Zero-pad the channel (lane) dim Cin -> Cinp in VMEM (no-op when
        the channel count is already 128-aligned)."""
        if Cinp == Cin:
            return a
        zeros = jnp.zeros(a.shape[:-1] + (Cinp - Cin,), a.dtype)
        return jnp.concatenate([a, zeros], axis=-1)

    # ---- s = x + y and 1x1 reduction conv on the main block (hides DMAs) ---
    s_mid = x_ref[0].astype(f32) + y_ref[0].astype(f32)        # (TH, W, Cin)
    s_mid2 = pad_lanes(s_mid.reshape(TH * W, Cin))             # (TH*W, Cinp)
    r_mid = jnp.dot(s_mid2.astype(mxu), w_red_ref[...],
                    preferred_element_type=f32)
    r_mid = jnp.maximum(r_mid + b_red_ref[...], 0.0).reshape(TH, W, Crp)

    # ---- halo rows of r (forced to zero outside the image) -----------------
    for cp in copies:
        cp.wait()
    s_halo = jnp.concatenate(
        [xt_buf[...].astype(f32) + yt_buf[...].astype(f32),
         xb_buf[...].astype(f32) + yb_buf[...].astype(f32)], axis=0)  # (2W, Cin)
    r_halo = jnp.dot(pad_lanes(s_halo).astype(mxu), w_red_ref[...],
                     preferred_element_type=f32)
    r_halo = jnp.maximum(r_halo + b_red_ref[...], 0.0).reshape(2, W, Crp)
    r_top = jnp.where(hb > 0, r_halo[0:1], 0.0)
    r_bot = jnp.where(hb < nhb - 1, r_halo[1:2], 0.0)

    # ---- 3x3 conv as 3 fat matmuls (dx folded into the contraction dim) ----
    # rcat (the largest intermediate) is built ONCE, directly in the MXU
    # dtype, so there are no per-dy casts of overlapping slabs.
    r_full = jnp.concatenate([r_top, r_mid, r_bot], axis=0).astype(mxu)
    zcol = jnp.zeros((TH + 2, 1, Crp), mxu)
    r_left = jnp.concatenate([zcol, r_full[:, :W - 1, :]], axis=1)   # col w-1
    r_right = jnp.concatenate([r_full[:, 1:, :], zcol], axis=1)      # col w+1
    rcat = jnp.concatenate([r_left, r_full, r_right], axis=-1)  # (TH+2, W, 3Crp)

    # Accumulator initialised with the dy=0 matmul (no zero-fill + add).
    acc = jnp.dot(rcat[0:TH].reshape(TH * W, 3 * Crp), w_rc_ref[0],
                  preferred_element_type=f32)
    for dy in (1, 2):
        acc = acc + jnp.dot(rcat[dy:dy + TH].reshape(TH * W, 3 * Crp),
                            w_rc_ref[dy], preferred_element_type=f32)
    rc = jnp.maximum(acc + b_rc_ref[...], 0.0)                 # (TH*W, Crp)

    # ---- 1x1 up conv, residual add, final 1x1 conv --------------------------
    up = jnp.dot(rc.astype(mxu), w_up_ref[...], preferred_element_type=f32)
    up = jnp.maximum(up + b_up_ref[...], 0.0)                  # (TH*W, Cinp)
    z = up + s_mid2
    out = jnp.dot(z.astype(mxu), w_out_ref[...], preferred_element_type=f32)
    out = jnp.maximum(out + b_out_ref[...], 0.0)               # (TH*W, Cout)

    o_ref[0] = out.reshape(TH, W, Cout).astype(o_ref.dtype)    # unpadded store


def _round_up(x, m):
    return (x + m - 1) // m * m


def _pad_axis(a, target, axis):
    pad = target - a.shape[axis]
    if pad == 0:
        return a
    widths = [(0, 0)] * a.ndim
    widths[axis] = (0, pad)
    return jnp.pad(a, widths)


@functools.lru_cache(maxsize=None)
def _vmem_capacity_bytes():
    """Per-core VMEM capacity; conservative 64 MiB fallback if unqueryable."""
    try:
        return int(pltpu.get_tpu_info().vmem_capacity_bytes)
    except Exception:
        return 64 << 20


def _auto_row_block(H, W, N, cin, cinp, crp, cout, act_sz, mxu_sz, budget_bytes):
    """Largest divisor of H whose per-step VMEM estimate fits budget_bytes,
    preferring grids with >= 2 total steps (keeps both v7x TensorCores busy)."""
    coutp = _round_up(cout, 128)
    # weights / biases: single buffer (memory_space=VMEM), real MXU itemsize
    wts = (cinp * crp + 9 * crp * crp + crp * cinp + cinp * cout) * mxu_sz
    wts += (2 * crp + cinp + cout) * 4                    # biases (f32)
    halo = 4 * W * max(cin, 128) * act_sz                 # halo rows (lane-padded)

    def fits(th):
        io = 2 * (2 * th * W * cin + th * W * cout) * act_sz   # x,y,out dbl-buf
        tmp = th * W * (2 * cinp * 4          # s (f32) + lane-padded copy
                        + 2 * crp * 4         # r_mid, acc/rc
                        + 3 * crp * mxu_sz    # one dy tap slab
                        + 2 * cinp * 4        # up, z
                        + cinp * mxu_sz       # z cast for the MXU
                        + coutp * 4)          # final conv output (f32)
        tmp += (th + 2) * W * 4 * crp * mxu_sz  # r_full + rcat (MXU dtype)
        return wts + halo + io + tmp <= budget_bytes

    good = [t for t in range(1, H + 1) if H % t == 0 and fits(t)]
    if not good:
        return 1
    multi = [t for t in good if N * (H // t) >= 2]
    return max(multi) if multi else max(good)


@functools.partial(jax.jit, static_argnames=("row_block", "mxu_dtype"))
def res_correction_forward_nhwc(x, y, params, *, row_block=None, mxu_dtype=None):
    """x, y: (N, H, W, in_ch) NHWC.  Returns (N, H, W, out_ch).
    mxu_dtype=jnp.bfloat16 narrows only the matmul operands (recommended on
    v5e / v6e / v7x); all element-wise math stays f32."""
    (w_red, b_red, w_rc, b_rc, w_up, b_up, w_out, b_out) = params
    N, H, W, Cin = x.shape
    Cr = w_red.shape[1]
    Cout = w_out.shape[1]

    cinp = _round_up(Cin, 128)
    crp = _round_up(Cr, 128)

    # Weights: pad contraction / intermediate channel dims to multiples of
    # 128 (padded channels stay exactly zero through every layer, so the math
    # is unchanged).  Activations are lane-padded inside the kernel, and the
    # final 1x1 conv writes the true out_ch directly (no HBM-side padding).
    mxu = jnp.dtype(mxu_dtype) if mxu_dtype is not None else jnp.float32
    w_red_p = _pad_axis(_pad_axis(w_red, cinp, 0), crp, 1).astype(mxu)
    w_rc_p = (_pad_axis(_pad_axis(w_rc, crp, 2), crp, 3)
              .reshape(3, 3 * crp, crp).astype(mxu))
    w_up_p = _pad_axis(_pad_axis(w_up, crp, 0), cinp, 1).astype(mxu)
    w_out_p = _pad_axis(w_out, cinp, 0).astype(mxu)        # (cinp, Cout)
    b_red_p = _pad_axis(b_red, crp, 1).astype(jnp.float32)
    b_rc_p = _pad_axis(b_rc, crp, 1).astype(jnp.float32)
    b_up_p = _pad_axis(b_up, cinp, 1).astype(jnp.float32)
    b_out_p = b_out.astype(jnp.float32)

    # Generation-aware VMEM policy (~38 MiB on 64-MiB v7x, ~77 MiB on 128-MiB).
    vmem_cap = _vmem_capacity_bytes()
    vmem_limit = max(32 << 20, min(int(vmem_cap * 0.6), 96 << 20))
    budget = vmem_limit - (6 << 20)            # headroom for Mosaic scratch

    act_sz = jnp.dtype(x.dtype).itemsize
    mxu_sz = jnp.dtype(mxu).itemsize
    th = row_block if row_block is not None else _auto_row_block(
        H, W, N, Cin, cinp, crp, Cout, act_sz, mxu_sz, budget)
    if H % th != 0:
        raise ValueError(f"row_block={th} must divide H={H}")
    nhb = H // th

    # Flat row view (N*H, W, Cin) for the manual halo DMAs (stays in HBM).
    x_rows = x.reshape(N * H, W, Cin)
    y_rows = y.reshape(N * H, W, Cin)

    # Weights / biases: whole array resident in VMEM once (single buffer).
    w_spec = pl.BlockSpec(memory_space=pltpu.MemorySpace.VMEM)

    return pl.pallas_call(
        _res_correction_kernel,
        out_shape=jax.ShapeDtypeStruct((N, H, W, Cout), x.dtype),
        grid_spec=pltpu.PrefetchScalarGridSpec(
            num_scalar_prefetch=0,
            grid=(N, nhb),
            in_specs=[
                pl.BlockSpec((1, th, W, Cin), lambda n, h: (n, h, 0, 0)),
                pl.BlockSpec((1, th, W, Cin), lambda n, h: (n, h, 0, 0)),
                pl.BlockSpec(memory_space=pl.ANY),      # x rows (halo DMAs)
                pl.BlockSpec(memory_space=pl.ANY),      # y rows (halo DMAs)
                w_spec, w_spec,                         # w_red, b_red
                w_spec, w_spec,                         # w_rc,  b_rc
                w_spec, w_spec,                         # w_up,  b_up
                w_spec, w_spec,                         # w_out, b_out
            ],
            out_specs=pl.BlockSpec((1, th, W, Cout), lambda n, h: (n, h, 0, 0)),
            scratch_shapes=[
                pltpu.VMEM((W, Cin), x.dtype),          # x top-halo row
                pltpu.VMEM((W, Cin), x.dtype),          # x bottom-halo row
                pltpu.VMEM((W, Cin), y.dtype),          # y top-halo row
                pltpu.VMEM((W, Cin), y.dtype),          # y bottom-halo row
                pltpu.SemaphoreType.DMA((4,)),
            ],
        ),
        compiler_params=pltpu.CompilerParams(
            dimension_semantics=("parallel", "parallel"),
            vmem_limit_bytes=vmem_limit,
        ),
    )(x, y, x_rows, y_rows,
      w_red_p, b_red_p, w_rc_p, b_rc_p, w_up_p, b_up_p, w_out_p, b_out_p)


def res_correction_forward(x_nchw, y_nchw, params, **kwargs):
    """PyTorch-layout compatibility wrapper: (N, C, H, W) in / out.
    Prefer res_correction_forward_nhwc (no boundary transposes)."""
    x = jnp.transpose(x_nchw, (0, 2, 3, 1))
    y = jnp.transpose(y_nchw, (0, 2, 3, 1))
    out = res_correction_forward_nhwc(x, y, params, **kwargs)
    return jnp.transpose(out, (0, 3, 1, 2))


def init_params(key, in_ch, out_ch, dtype=jnp.float32):
    """Deterministic synthetic weights.  Layouts: 1x1 conv (Cin, Cout),
    3x3 conv (kh, kw, Cin, Cout) (i.e. HWIO), biases (1, C)."""
    cr = in_ch // 4
    ks = jax.random.split(key, 8)

    def w(k, shape, fan_in):
        return (jax.random.normal(k, shape, jnp.float32)
                / jnp.sqrt(float(fan_in))).astype(dtype)

    w_red = w(ks[0], (in_ch, cr), in_ch)
    b_red = w(ks[1], (1, cr), in_ch)
    w_rc = w(ks[2], (3, 3, cr, cr), 9 * cr)
    b_rc = w(ks[3], (1, cr), 9 * cr)
    w_up = w(ks[4], (cr, in_ch), cr)
    b_up = w(ks[5], (1, in_ch), cr)
    w_out = w(ks[6], (in_ch, out_ch), in_ch)
    b_out = w(ks[7], (1, out_ch), in_ch)
    return (w_red, b_red, w_rc, b_rc, w_up, b_up, w_out, b_out)


def _reference_forward_nhwc(x, y, params):
    """Pure-JAX NHWC reference (matches the PyTorch module's math)."""
    (w_red, b_red, w_rc, b_rc, w_up, b_up, w_out, b_out) = params
    s = x + y

    def conv1x1_relu(v, w, b):
        return jax.nn.relu(jnp.einsum('nhwc,cd->nhwd', v, w)
                           + b.reshape(1, 1, 1, -1))

    r = conv1x1_relu(s, w_red, b_red)
    rc = lax.conv_general_dilated(r, w_rc, (1, 1), 'SAME',
                                  dimension_numbers=('NHWC', 'HWIO', 'NHWC'))
    rc = jax.nn.relu(rc + b_rc.reshape(1, 1, 1, -1))
    up = conv1x1_relu(rc, w_up, b_up)
    z = up + s
    return conv1x1_relu(z, w_out, b_out)


if __name__ == "__main__":
    key = jax.random.PRNGKey(0)
    k_x, k_y, k_p = jax.random.split(key, 3)

    N, in_ch, out_ch, H, W = 2, 16, 8, 16, 16
    x = jax.random.normal(k_x, (N, H, W, in_ch), jnp.float32)   # NHWC
    y = jax.random.normal(k_y, (N, H, W, in_ch), jnp.float32)
    params = init_params(k_p, in_ch, out_ch)

    ref = jax.block_until_ready(_reference_forward_nhwc(x, y, params))

    # f32 path; row_block=8 -> grid (2, 2), exercises the halo DMAs.
    out = jax.block_until_ready(
        res_correction_forward_nhwc(x, y, params, row_block=8))
    assert out.shape == (N, H, W, out_ch), out.shape
    assert jnp.allclose(out, ref, rtol=1e-4, atol=1e-4), "f32 mismatch vs reference"

    # Auto row_block path (generation-aware VMEM budget, >=2 grid steps).
    out_auto = jax.block_until_ready(res_correction_forward_nhwc(x, y, params))
    assert jnp.allclose(out_auto, ref, rtol=1e-4, atol=1e-4), "auto-tile mismatch"

    # bf16-MXU path (recommended on v5e / v6e / v7x); loose tolerance check.
    out_bf16 = jax.block_until_ready(
        res_correction_forward_nhwc(x, y, params, row_block=8,
                                    mxu_dtype=jnp.bfloat16))
    assert jnp.allclose(out_bf16, ref, rtol=1e-1, atol=1e-1), "bf16 mismatch"

    # NCHW (PyTorch layout) compatibility wrapper.
    out_nchw = jax.block_until_ready(
        res_correction_forward(jnp.transpose(x, (0, 3, 1, 2)),
                               jnp.transpose(y, (0, 3, 1, 2)),
                               params, row_block=8))
    assert jnp.allclose(jnp.transpose(out_nchw, (0, 2, 3, 1)), ref,
                        rtol=1e-4, atol=1e-4), "NCHW wrapper mismatch"

    print("KERNEL_OK")
</pallas_src>

<mosaic_0001>
module attributes {stable_mosaic.version = 11 : i64} {
  func.func @_res_correction_kernel(%arg0: i32, %arg1: i32, %arg2: memref<1x8x16x16xf32, #tpu.memory_space<vmem>>, %arg3: memref<1x8x16x16xf32, #tpu.memory_space<vmem>>, %arg4: memref<32x16x16xf32, #tpu.memory_space<any>>, %arg5: memref<32x16x16xf32, #tpu.memory_space<any>>, %arg6: memref<128x128xf32, #tpu.memory_space<vmem>>, %arg7: memref<1x128xf32, #tpu.memory_space<vmem>>, %arg8: memref<3x384x128xf32, #tpu.memory_space<vmem>>, %arg9: memref<1x128xf32, #tpu.memory_space<vmem>>, %arg10: memref<128x128xf32, #tpu.memory_space<vmem>>, %arg11: memref<1x128xf32, #tpu.memory_space<vmem>>, %arg12: memref<128x8xf32, #tpu.memory_space<vmem>>, %arg13: memref<1x8xf32, #tpu.memory_space<vmem>>, %arg14: memref<1x8x16x8xf32, #tpu.memory_space<vmem>>, %arg15: memref<16x16xf32, #tpu.memory_space<vmem>>, %arg16: memref<16x16xf32, #tpu.memory_space<vmem>>, %arg17: memref<16x16xf32, #tpu.memory_space<vmem>>, %arg18: memref<16x16xf32, #tpu.memory_space<vmem>>, %arg19: memref<4x!tpu.dma_semaphore, #tpu.memory_space<semaphore_mem>>) attributes {dimension_semantics = [#tpu.dimension_semantics<parallel>, #tpu.dimension_semantics<parallel>], iteration_bounds = array<i64: 2, 2>, scalar_prefetch = 0 : i64, scratch_operands = 5 : i64, tpu.core_type = #tpu.core_type<tc>, window_params = [{transform_indices = @transform_0, window_bounds = array<i64: 1, 8, 16, 16>}, {transform_indices = @transform_1, window_bounds = array<i64: 1, 8, 16, 16>}, {}, {}, {pipeline_mode = #tpu.pipeline_mode<synchronous>, transform_indices = @transform_4, window_bounds = array<i64: 128, 128>}, {pipeline_mode = #tpu.pipeline_mode<synchronous>, transform_indices = @transform_5, window_bounds = array<i64: 1, 128>}, {pipeline_mode = #tpu.pipeline_mode<synchronous>, transform_indices = @transform_6, window_bounds = array<i64: 3, 384, 128>}, {pipeline_mode = #tpu.pipeline_mode<synchronous>, transform_indices = @transform_7, window_bounds = array<i64: 1, 128>}, {pipeline_mode = #tpu.pipeline_mode<synchronous>, transform_indices = @transform_8, window_bounds = array<i64: 128, 128>}, {pipeline_mode = #tpu.pipeline_mode<synchronous>, transform_indices = @transform_9, window_bounds = array<i64: 1, 128>}, {pipeline_mode = #tpu.pipeline_mode<synchronous>, transform_indices = @transform_10, window_bounds = array<i64: 128, 8>}, {pipeline_mode = #tpu.pipeline_mode<synchronous>, transform_indices = @transform_11, window_bounds = array<i64: 1, 8>}, {transform_indices = @transform_12, window_bounds = array<i64: 1, 8, 16, 8>}]} {
    %c8_i32 = arith.constant 8 : i32
    %0 = arith.muli %arg1, %c8_i32 : i32
    %c16_i32 = arith.constant 16 : i32
    %1 = arith.muli %arg0, %c16_i32 : i32
    %c1_i32 = arith.constant 1 : i32
    %2 = arith.subi %0, %c1_i32 : i32
    %c0_i32 = arith.constant 0 : i32
    %3 = arith.maxsi %2, %c0_i32 : i32
    %4 = arith.addi %1, %3 : i32
    %c16_i32_0 = arith.constant 16 : i32
    %5 = arith.muli %arg0, %c16_i32_0 : i32
    %c8_i32_1 = arith.constant 8 : i32
    %6 = arith.addi %0, %c8_i32_1 : i32
    %c15_i32 = arith.constant 15 : i32
    %7 = arith.minsi %6, %c15_i32 : i32
    %8 = arith.addi %5, %7 : i32
    %c0_i32_2 = arith.constant 0 : i32
    %c0_i32_3 = arith.constant 0 : i32
    %c0_i32_4 = arith.constant 0 : i32
    %9 = tpu.memref_slice %arg4[%4, %c0_i32_3, %c0_i32_4] : memref<32x16x16xf32, #tpu.memory_space<any>> -> memref<1x16x16xf32, #tpu.memory_space<any>>
    %10 = tpu.memref_squeeze %9 : memref<1x16x16xf32, #tpu.memory_space<any>> -> memref<16x16xf32, #tpu.memory_space<any>>
    %11 = tpu.memref_slice %arg19[%c0_i32_2] : memref<4x!tpu.dma_semaphore, #tpu.memory_space<semaphore_mem>> -> memref<1x!tpu.dma_semaphore, #tpu.memory_space<semaphore_mem>>
    %12 = tpu.memref_squeeze %11 : memref<1x!tpu.dma_semaphore, #tpu.memory_space<semaphore_mem>> -> memref<!tpu.dma_semaphore, #tpu.memory_space<semaphore_mem>>
    tpu.enqueue_dma source(%10 : memref<16x16xf32, #tpu.memory_space<any>>) target(%arg15 : memref<16x16xf32, #tpu.memory_space<vmem>>) target_semaphore(%12 : memref<!tpu.dma_semaphore, #tpu.memory_space<semaphore_mem>>)
    %c1_i32_5 = arith.constant 1 : i32
    %c0_i32_6 = arith.constant 0 : i32
    %c0_i32_7 = arith.constant 0 : i32
    %13 = tpu.memref_slice %arg5[%4, %c0_i32_6, %c0_i32_7] : memref<32x16x16xf32, #tpu.memory_space<any>> -> memref<1x16x16xf32, #tpu.memory_space<any>>
    %14 = tpu.memref_squeeze %13 : memref<1x16x16xf32, #tpu.memory_space<any>> -> memref<16x16xf32, #tpu.memory_space<any>>
    %15 = tpu.memref_slice %arg19[%c1_i32_5] : memref<4x!tpu.dma_semaphore, #tpu.memory_space<semaphore_mem>> -> memref<1x!tpu.dma_semaphore, #tpu.memory_space<semaphore_mem>>
    %16 = tpu.memref_squeeze %15 : memref<1x!tpu.dma_semaphore, #tpu.memory_space<semaphore_mem>> -> memref<!tpu.dma_semaphore, #tpu.memory_space<semaphore_mem>>
    tpu.enqueue_dma source(%14 : memref<16x16xf32, #tpu.memory_space<any>>) target(%arg17 : memref<16x16xf32, #tpu.memory_space<vmem>>) target_semaphore(%16 : memref<!tpu.dma_semaphore, #tpu.memory_space<semaphore_mem>>)
    %c2_i32 = arith.constant 2 : i32
    %c0_i32_8 = arith.constant 0 : i32
    %c0_i32_9 = arith.constant 0 : i32
    %17 = tpu.memref_slice %arg4[%8, %c0_i32_8, %c0_i32_9] : memref<32x16x16xf32, #tpu.memory_space<any>> -> memref<1x16x16xf32, #tpu.memory_space<any>>
    %18 = tpu.memref_squeeze %17 : memref<1x16x16xf32, #tpu.memory_space<any>> -> memref<16x16xf32, #tpu.memory_space<any>>
    %19 = tpu.memref_slice %arg19[%c2_i32] : memref<4x!tpu.dma_semaphore, #tpu.memory_space<semaphore_mem>> -> memref<1x!tpu.dma_semaphore, #tpu.memory_space<semaphore_mem>>
    %20 = tpu.memref_squeeze %19 : memref<1x!tpu.dma_semaphore, #tpu.memory_space<semaphore_mem>> -> memref<!tpu.dma_semaphore, #tpu.memory_space<semaphore_mem>>
    tpu.enqueue_dma source(%18 : memref<16x16xf32, #tpu.memory_space<any>>) target(%arg16 : memref<16x16xf32, #tpu.memory_space<vmem>>) target_semaphore(%20 : memref<!tpu.dma_semaphore, #tpu.memory_space<semaphore_mem>>)
    %c3_i32 = arith.constant 3 : i32
    %c0_i32_10 = arith.constant 0 : i32
    %c0_i32_11 = arith.constant 0 : i32
    %21 = tpu.memref_slice %arg5[%8, %c0_i32_10, %c0_i32_11] : memref<32x16x16xf32, #tpu.memory_space<any>> -> memref<1x16x16xf32, #tpu.memory_space<any>>
    %22 = tpu.memref_squeeze %21 : memref<1x16x16xf32, #tpu.memory_space<any>> -> memref<16x16xf32, #tpu.memory_space<any>>
    %23 = tpu.memref_slice %arg19[%c3_i32] : memref<4x!tpu.dma_semaphore, #tpu.memory_space<semaphore_mem>> -> memref<1x!tpu.dma_semaphore, #tpu.memory_space<semaphore_mem>>
    %24 = tpu.memref_squeeze %23 : memref<1x!tpu.dma_semaphore, #tpu.memory_space<semaphore_mem>> -> memref<!tpu.dma_semaphore, #tpu.memory_space<semaphore_mem>>
    tpu.enqueue_dma source(%22 : memref<16x16xf32, #tpu.memory_space<any>>) target(%arg18 : memref<16x16xf32, #tpu.memory_space<vmem>>) target_semaphore(%24 : memref<!tpu.dma_semaphore, #tpu.memory_space<semaphore_mem>>)
    %c0 = arith.constant 0 : index
    %c0_12 = arith.constant 0 : index
    %c0_13 = arith.constant 0 : index
    %c0_14 = arith.constant 0 : index
    %25 = vector.load %arg2[%c0, %c0_12, %c0_13, %c0_14] : memref<1x8x16x16xf32, #tpu.memory_space<vmem>>, vector<1x8x16x16xf32>
    %26 = vector.shape_cast %25 : vector<1x8x16x16xf32> to vector<8x16x16xf32>
    %c0_15 = arith.constant 0 : index
    %c0_16 = arith.constant 0 : index
    %c0_17 = arith.constant 0 : index
    %c0_18 = arith.constant 0 : index
    %27 = vector.load %arg3[%c0_15, %c0_16, %c0_17, %c0_18] : memref<1x8x16x16xf32, #tpu.memory_space<vmem>>, vector<1x8x16x16xf32>
    %28 = vector.shape_cast %27 : vector<1x8x16x16xf32> to vector<8x16x16xf32>
    %29 = arith.addf %26, %28 : vector<8x16x16xf32>
    %30 = vector.shape_cast %29 : vector<8x16x16xf32> to vector<128x16xf32>
    %cst = arith.constant 0.000000e+00 : f32
    %31 = vector.broadcast %cst : f32 to vector<128x112xf32>
    %32 = tpu.concatenate %30, %31 in 1 : vector<128x16xf32>, vector<128x112xf32> -> vector<128x128xf32>
    %c0_19 = arith.constant 0 : index
    %c0_20 = arith.constant 0 : index
    %33 = vector.load %arg6[%c0_19, %c0_20] : memref<128x128xf32, #tpu.memory_space<vmem>>, vector<128x128xf32>
    %cst_21 = arith.constant dense<0.000000e+00> : vector<128x128xf32>
    %34 = tpu.matmul %32, %33, %cst_21 {dimension_numbers = #tpu.dot_dimension_numbers<[1], [0], [0], [1], [0, 0, 1, 1], [], []>} : vector<128x128xf32>, vector<128x128xf32>, vector<128x128xf32> -> vector<128x128xf32>
    %c0_22 = arith.constant 0 : index
    %c0_23 = arith.constant 0 : index
    %35 = vector.load %arg7[%c0_22, %c0_23] : memref<1x128xf32, #tpu.memory_space<vmem>>, vector<1x128xf32>
    %36 = vector.broadcast %35 : vector<1x128xf32> to vector<128x128xf32>
    %37 = arith.addf %34, %36 : vector<128x128xf32>
    %cst_24 = arith.constant 0.000000e+00 : f32
    %38 = vector.broadcast %cst_24 : f32 to vector<128x128xf32>
    %39 = arith.maximumf %37, %38 : vector<128x128xf32>
    %40 = vector.shape_cast %39 : vector<128x128xf32> to vector<8x16x128xf32>
    %c0_i32_25 = arith.constant 0 : i32
    %c0_i32_26 = arith.constant 0 : i32
    %c0_i32_27 = arith.constant 0 : i32
    %41 = tpu.memref_slice %arg4[%4, %c0_i32_26, %c0_i32_27] : memref<32x16x16xf32, #tpu.memory_space<any>> -> memref<1x16x16xf32, #tpu.memory_space<any>>
    %42 = tpu.memref_squeeze %41 : memref<1x16x16xf32, #tpu.memory_space<any>> -> memref<16x16xf32, #tpu.memory_space<any>>
    %43 = tpu.memref_slice %arg19[%c0_i32_25] : memref<4x!tpu.dma_semaphore, #tpu.memory_space<semaphore_mem>> -> memref<1x!tpu.dma_semaphore, #tpu.memory_space<semaphore_mem>>
    %44 = tpu.memref_squeeze %43 : memref<1x!tpu.dma_semaphore, #tpu.memory_space<semaphore_mem>> -> memref<!tpu.dma_semaphore, #tpu.memory_space<semaphore_mem>>
    tpu.wait_dma2 semaphore(%44 : memref<!tpu.dma_semaphore, #tpu.memory_space<semaphore_mem>>) src(%42 : memref<16x16xf32, #tpu.memory_space<any>>) dst(%arg15 : memref<16x16xf32, #tpu.memory_space<vmem>>)
    %c1_i32_28 = arith.constant 1 : i32
    %c0_i32_29 = arith.constant 0 : i32
    %c0_i32_30 = arith.constant 0 : i32
    %45 = tpu.memref_slice %arg5[%4, %c0_i32_29, %c0_i32_30] : memref<32x16x16xf32, #tpu.memory_space<any>> -> memref<1x16x16xf32, #tpu.memory_space<any>>
    %46 = tpu.memref_squeeze %45 : memref<1x16x16xf32, #tpu.memory_space<any>> -> memref<16x16xf32, #tpu.memory_space<any>>
    %47 = tpu.memref_slice %arg19[%c1_i32_28] : memref<4x!tpu.dma_semaphore, #tpu.memory_space<semaphore_mem>> -> memref<1x!tpu.dma_semaphore, #tpu.memory_space<semaphore_mem>>
    %48 = tpu.memref_squeeze %47 : memref<1x!tpu.dma_semaphore, #tpu.memory_space<semaphore_mem>> -> memref<!tpu.dma_semaphore, #tpu.memory_space<semaphore_mem>>
    tpu.wait_dma2 semaphore(%48 : memref<!tpu.dma_semaphore, #tpu.memory_space<semaphore_mem>>) src(%46 : memref<16x16xf32, #tpu.memory_space<any>>) dst(%arg17 : memref<16x16xf32, #tpu.memory_space<vmem>>)
    %c2_i32_31 = arith.constant 2 : i32
    %c0_i32_32 = arith.constant 0 : i32
    %c0_i32_33 = arith.constant 0 : i32
    %49 = tpu.memref_slice %arg4[%8, %c0_i32_32, %c0_i32_33] : memref<32x16x16xf32, #tpu.memory_space<any>> -> memref<1x16x16xf32, #tpu.memory_space<any>>
    %50 = tpu.memref_squeeze %49 : memref<1x16x16xf32, #tpu.memory_space<any>> -> memref<16x16xf32, #tpu.memory_space<any>>
    %51 = tpu.memref_slice %arg19[%c2_i32_31] : memref<4x!tpu.dma_semaphore, #tpu.memory_space<semaphore_mem>> -> memref<1x!tpu.dma_semaphore, #tpu.memory_space<semaphore_mem>>
    %52 = tpu.memref_squeeze %51 : memref<1x!tpu.dma_semaphore, #tpu.memory_space<semaphore_mem>> -> memref<!tpu.dma_semaphore, #tpu.memory_space<semaphore_mem>>
    tpu.wait_dma2 semaphore(%52 : memref<!tpu.dma_semaphore, #tpu.memory_space<semaphore_mem>>) src(%50 : memref<16x16xf32, #tpu.memory_space<any>>) dst(%arg16 : memref<16x16xf32, #tpu.memory_space<vmem>>)
    %c3_i32_34 = arith.constant 3 : i32
    %c0_i32_35 = arith.constant 0 : i32
    %c0_i32_36 = arith.constant 0 : i32
    %53 = tpu.memref_slice %arg5[%8, %c0_i32_35, %c0_i32_36] : memref<32x16x16xf32, #tpu.memory_space<any>> -> memref<1x16x16xf32, #tpu.memory_space<any>>
    %54 = tpu.memref_squeeze %53 : memref<1x16x16xf32, #tpu.memory_space<any>> -> memref<16x16xf32, #tpu.memory_space<any>>
    %55 = tpu.memref_slice %arg19[%c3_i32_34] : memref<4x!tpu.dma_semaphore, #tpu.memory_space<semaphore_mem>> -> memref<1x!tpu.dma_semaphore, #tpu.memory_space<semaphore_mem>>
    %56 = tpu.memref_squeeze %55 : memref<1x!tpu.dma_semaphore, #tpu.memory_space<semaphore_mem>> -> memref<!tpu.dma_semaphore, #tpu.memory_space<semaphore_mem>>
    tpu.wait_dma2 semaphore(%56 : memref<!tpu.dma_semaphore, #tpu.memory_space<semaphore_mem>>) src(%54 : memref<16x16xf32, #tpu.memory_space<any>>) dst(%arg18 : memref<16x16xf32, #tpu.memory_space<vmem>>)
    %c0_37 = arith.constant 0 : index
    %c0_38 = arith.constant 0 : index
    %57 = vector.load %arg15[%c0_37, %c0_38] : memref<16x16xf32, #tpu.memory_space<vmem>>, vector<16x16xf32>
    %c0_39 = arith.constant 0 : index
    %c0_40 = arith.constant 0 : index
    %58 = vector.load %arg17[%c0_39, %c0_40] : memref<16x16xf32, #tpu.memory_space<vmem>>, vector<16x16xf32>
    %59 = arith.addf %57, %58 : vector<16x16xf32>
    %c0_41 = arith.constant 0 : index
    %c0_42 = arith.constant 0 : index
    %60 = vector.load %arg16[%c0_41, %c0_42] : memref<16x16xf32, #tpu.memory_space<vmem>>, vector<16x16xf32>
    %c0_43 = arith.constant 0 : index
    %c0_44 = arith.constant 0 : index
    %61 = vector.load %arg18[%c0_43, %c0_44] : memref<16x16xf32, #tpu.memory_space<vmem>>, vector<16x16xf32>
    %62 = arith.addf %60, %61 : vector<16x16xf32>
    %63 = tpu.concatenate %59, %62 in 0 : vector<16x16xf32>, vector<16x16xf32> -> vector<32x16xf32>
    %cst_45 = arith.constant 0.000000e+00 : f32
    %64 = vector.broadcast %cst_45 : f32 to vector<32x112xf32>
    %65 = tpu.concatenate %63, %64 in 1 : vector<32x16xf32>, vector<32x112xf32> -> vector<32x128xf32>
    %c0_46 = arith.constant 0 : index
    %c0_47 = arith.constant 0 : index
    %66 = vector.load %arg6[%c0_46, %c0_47] : memref<128x128xf32, #tpu.memory_space<vmem>>, vector<128x128xf32>
    %cst_48 = arith.constant dense<0.000000e+00> : vector<32x128xf32>
    %67 = tpu.matmul %65, %66, %cst_48 {dimension_numbers = #tpu.dot_dimension_numbers<[1], [0], [0], [1], [0, 0, 1, 1], [], []>} : vector<32x128xf32>, vector<128x128xf32>, vector<32x128xf32> -> vector<32x128xf32>
    %c0_49 = arith.constant 0 : index
    %c0_50 = arith.constant 0 : index
    %68 = vector.load %arg7[%c0_49, %c0_50] : memref<1x128xf32, #tpu.memory_space<vmem>>, vector<1x128xf32>
    %69 = vector.broadcast %68 : vector<1x128xf32> to vector<32x128xf32>
    %70 = arith.addf %67, %69 : vector<32x128xf32>
    %cst_51 = arith.constant 0.000000e+00 : f32
    %71 = vector.broadcast %cst_51 : f32 to vector<32x128xf32>
    %72 = arith.maximumf %70, %71 : vector<32x128xf32>
    %73 = vector.shape_cast %72 : vector<32x128xf32> to vector<2x16x128xf32>
    %c0_i32_52 = arith.constant 0 : i32
    %74 = arith.cmpi sgt, %arg1, %c0_i32_52 : i32
    %75 = vector.extract_strided_slice %73 {offsets = [0, 0, 0], sizes = [1, 16, 128], strides = [1, 1, 1]} : vector<2x16x128xf32> to vector<1x16x128xf32>
    %cst_53 = arith.constant 0.000000e+00 : f32
    %76 = vector.broadcast %cst_53 : f32 to vector<1x16x128xf32>
    %77 = arith.select %74, %75, %76 : vector<1x16x128xf32>
    %c1_i32_54 = arith.constant 1 : i32
    %78 = arith.cmpi slt, %arg1, %c1_i32_54 : i32
    %79 = vector.extract_strided_slice %73 {offsets = [1, 0, 0], sizes = [1, 16, 128], strides = [1, 1, 1]} : vector<2x16x128xf32> to vector<1x16x128xf32>
    %cst_55 = arith.constant 0.000000e+00 : f32
    %80 = vector.broadcast %cst_55 : f32 to vector<1x16x128xf32>
    %81 = arith.select %78, %79, %80 : vector<1x16x128xf32>
    %82 = tpu.concatenate %77, %40, %81 in 0 : vector<1x16x128xf32>, vector<8x16x128xf32>, vector<1x16x128xf32> -> vector<10x16x128xf32>
    %cst_56 = arith.constant 0.000000e+00 : f32
    %83 = vector.broadcast %cst_56 : f32 to vector<10x1x128xf32>
    %84 = vector.extract_strided_slice %82 {offsets = [0, 0, 0], sizes = [10, 15, 128], strides = [1, 1, 1]} : vector<10x16x128xf32> to vector<10x15x128xf32>
    %85 = tpu.concatenate %83, %84 in 1 : vector<10x1x128xf32>, vector<10x15x128xf32> -> vector<10x16x128xf32>
    %86 = vector.extract_strided_slice %82 {offsets = [0, 1, 0], sizes = [10, 15, 128], strides = [1, 1, 1]} : vector<10x16x128xf32> to vector<10x15x128xf32>
    %87 = tpu.concatenate %86, %83 in 1 : vector<10x15x128xf32>, vector<10x1x128xf32> -> vector<10x16x128xf32>
    %88 = tpu.concatenate %85, %82, %87 in 2 : vector<10x16x128xf32>, vector<10x16x128xf32>, vector<10x16x128xf32> -> vector<10x16x384xf32>
    %89 = vector.extract_strided_slice %88 {offsets = [0, 0, 0], sizes = [8, 16, 384], strides = [1, 1, 1]} : vector<10x16x384xf32> to vector<8x16x384xf32>
    %90 = vector.shape_cast %89 : vector<8x16x384xf32> to vector<128x384xf32>
    %c0_57 = arith.constant 0 : index
    %c0_58 = arith.constant 0 : index
    %c0_59 = arith.constant 0 : index
    %91 = vector.load %arg8[%c0_57, %c0_58, %c0_59] : memref<3x384x128xf32, #tpu.memory_space<vmem>>, vector<1x384x128xf32>
    %92 = vector.shape_cast %91 : vector<1x384x128xf32> to vector<384x128xf32>
    %cst_60 = arith.constant dense<0.000000e+00> : vector<128x128xf32>
    %93 = tpu.matmul %90, %92, %cst_60 {dimension_numbers = #tpu.dot_dimension_numbers<[1], [0], [0], [1], [0, 0, 1, 1], [], []>} : vector<128x384xf32>, vector<384x128xf32>, vector<128x128xf32> -> vector<128x128xf32>
    %94 = vector.extract_strided_slice %88 {offsets = [1, 0, 0], sizes = [8, 16, 384], strides = [1, 1, 1]} : vector<10x16x384xf32> to vector<8x16x384xf32>
    %95 = vector.shape_cast %94 : vector<8x16x384xf32> to vector<128x384xf32>
    %c1 = arith.constant 1 : index
    %c0_61 = arith.constant 0 : index
    %c0_62 = arith.constant 0 : index
    %96 = vector.load %arg8[%c1, %c0_61, %c0_62] : memref<3x384x128xf32, #tpu.memory_space<vmem>>, vector<1x384x128xf32>
    %97 = vector.shape_cast %96 : vector<1x384x128xf32> to vector<384x128xf32>
    %cst_63 = arith.constant dense<0.000000e+00> : vector<128x128xf32>
    %98 = tpu.matmul %95, %97, %cst_63 {dimension_numbers = #tpu.dot_dimension_numbers<[1], [0], [0], [1], [0, 0, 1, 1], [], []>} : vector<128x384xf32>, vector<384x128xf32>, vector<128x128xf32> -> vector<128x128xf32>
    %99 = arith.addf %93, %98 : vector<128x128xf32>
    %100 = vector.extract_strided_slice %88 {offsets = [2, 0, 0], sizes = [8, 16, 384], strides = [1, 1, 1]} : vector<10x16x384xf32> to vector<8x16x384xf32>
    %101 = vector.shape_cast %100 : vector<8x16x384xf32> to vector<128x384xf32>
    %c2 = arith.constant 2 : index
    %c0_64 = arith.constant 0 : index
    %c0_65 = arith.constant 0 : index
    %102 = vector.load %arg8[%c2, %c0_64, %c0_65] : memref<3x384x128xf32, #tpu.memory_space<vmem>>, vector<1x384x128xf32>
    %103 = vector.shape_cast %102 : vector<1x384x128xf32> to vector<384x128xf32>
    %cst_66 = arith.constant dense<0.000000e+00> : vector<128x128xf32>
    %104 = tpu.matmul %101, %103, %cst_66 {dimension_numbers = #tpu.dot_dimension_numbers<[1], [0], [0], [1], [0, 0, 1, 1], [], []>} : vector<128x384xf32>, vector<384x128xf32>, vector<128x128xf32> -> vector<128x128xf32>
    %105 = arith.addf %99, %104 : vector<128x128xf32>
    %c0_67 = arith.constant 0 : index
    %c0_68 = arith.constant 0 : index
    %106 = vector.load %arg9[%c0_67, %c0_68] : memref<1x128xf32, #tpu.memory_space<vmem>>, vector<1x128xf32>
    %107 = vector.broadcast %106 : vector<1x128xf32> to vector<128x128xf32>
    %108 = arith.addf %105, %107 : vector<128x128xf32>
    %cst_69 = arith.constant 0.000000e+00 : f32
    %109 = vector.broadcast %cst_69 : f32 to vector<128x128xf32>
    %110 = arith.maximumf %108, %109 : vector<128x128xf32>
    %c0_70 = arith.constant 0 : index
    %c0_71 = arith.constant 0 : index
    %111 = vector.load %arg10[%c0_70, %c0_71] : memref<128x128xf32, #tpu.memory_space<vmem>>, vector<128x128xf32>
    %cst_72 = arith.constant dense<0.000000e+00> : vector<128x128xf32>
    %112 = tpu.matmul %110, %111, %cst_72 {dimension_numbers = #tpu.dot_dimension_numbers<[1], [0], [0], [1], [0, 0, 1, 1], [], []>} : vector<128x128xf32>, vector<128x128xf32>, vector<128x128xf32> -> vector<128x128xf32>
    %c0_73 = arith.constant 0 : index
    %c0_74 = arith.constant 0 : index
    %113 = vector.load %arg11[%c0_73, %c0_74] : memref<1x128xf32, #tpu.memory_space<vmem>>, vector<1x128xf32>
    %114 = vector.broadcast %113 : vector<1x128xf32> to vector<128x128xf32>
    %115 = arith.addf %112, %114 : vector<128x128xf32>
    %cst_75 = arith.constant 0.000000e+00 : f32
    %116 = vector.broadcast %cst_75 : f32 to vector<128x128xf32>
    %117 = arith.maximumf %115, %116 : vector<128x128xf32>
    %118 = arith.addf %117, %32 : vector<128x128xf32>
    %c0_76 = arith.constant 0 : index
    %c0_77 = arith.constant 0 : index
    %119 = vector.load %arg12[%c0_76, %c0_77] : memref<128x8xf32, #tpu.memory_space<vmem>>, vector<128x8xf32>
    %cst_78 = arith.constant dense<0.000000e+00> : vector<128x8xf32>
    %120 = tpu.matmul %118, %119, %cst_78 {dimension_numbers = #tpu.dot_dimension_numbers<[1], [0], [0], [1], [0, 0, 1, 1], [], []>} : vector<128x128xf32>, vector<128x8xf32>, vector<128x8xf32> -> vector<128x8xf32>
    %c0_79 = arith.constant 0 : index
    %c0_80 = arith.constant 0 : index
    %121 = vector.load %arg13[%c0_79, %c0_80] : memref<1x8xf32, #tpu.memory_space<vmem>>, vector<1x8xf32>
    %122 = vector.broadcast %121 : vector<1x8xf32> to vector<128x8xf32>
    %123 = arith.addf %120, %122 : vector<128x8xf32>
    %cst_81 = arith.constant 0.000000e+00 : f32
    %124 = vector.broadcast %cst_81 : f32 to vector<128x8xf32>
    %125 = arith.maximumf %123, %124 : vector<128x8xf32>
    %126 = vector.shape_cast %125 : vector<128x8xf32> to vector<8x16x8xf32>
    %c0_82 = arith.constant 0 : index
    %c0_83 = arith.constant 0 : index
    %c0_84 = arith.constant 0 : index
    %c0_85 = arith.constant 0 : index
    %127 = vector.load %arg14[%c0_82, %c0_83, %c0_84, %c0_85] : memref<1x8x16x8xf32, #tpu.memory_space<vmem>>, vector<1x8x16x8xf32>
    %128 = vector.shape_cast %127 : vector<1x8x16x8xf32> to vector<8x16x8xf32>
    %129 = vector.shape_cast %126 : vector<8x16x8xf32> to vector<1x8x16x8xf32>
    tpu.vector_store %arg14[%c0_82, %c0_83, %c0_84, %c0_85], %129 {strides = array<i32>} : memref<1x8x16x8xf32, #tpu.memory_space<vmem>>, vector<1x8x16x8xf32>,
    return
  }
  func.func @transform_0(%arg0: i32, %arg1: i32) -> (i32, i32, i32, i32) {
    %c0_i32 = arith.constant 0 : i32
    %c0_i32_0 = arith.constant 0 : i32
    %c0_i32_1 = arith.constant 0 : i32
    return %arg0, %arg1, %c0_i32, %c0_i32_0 : i32, i32, i32, i32
  }
  func.func @transform_1(%arg0: i32, %arg1: i32) -> (i32, i32, i32, i32) {
    %c0_i32 = arith.constant 0 : i32
    %c0_i32_0 = arith.constant 0 : i32
    %c0_i32_1 = arith.constant 0 : i32
    return %arg0, %arg1, %c0_i32, %c0_i32_0 : i32, i32, i32, i32
  }
  func.func @transform_4(%arg0: i32, %arg1: i32) -> (i32, i32) {
    %c0_i32 = arith.constant 0 : i32
    %c0_i32_0 = arith.constant 0 : i32
    %c0_i32_1 = arith.constant 0 : i32
    return %c0_i32, %c0_i32_0 : i32, i32
  }
  func.func @transform_5(%arg0: i32, %arg1: i32) -> (i32, i32) {
    %c0_i32 = arith.constant 0 : i32
    %c0_i32_0 = arith.constant 0 : i32
    %c0_i32_1 = arith.constant 0 : i32
    return %c0_i32, %c0_i32_0 : i32, i32
  }
  func.func @transform_6(%arg0: i32, %arg1: i32) -> (i32, i32, i32) {
    %c0_i32 = arith.constant 0 : i32
    %c0_i32_0 = arith.constant 0 : i32
    %c0_i32_1 = arith.constant 0 : i32
    %c0_i32_2 = arith.constant 0 : i32
    return %c0_i32, %c0_i32_0, %c0_i32_1 : i32, i32, i32
  }
  func.func @transform_7(%arg0: i32, %arg1: i32) -> (i32, i32) {
    %c0_i32 = arith.constant 0 : i32
    %c0_i32_0 = arith.constant 0 : i32
    %c0_i32_1 = arith.constant 0 : i32
    return %c0_i32, %c0_i32_0 : i32, i32
  }
  func.func @transform_8(%arg0: i32, %arg1: i32) -> (i32, i32) {
    %c0_i32 = arith.constant 0 : i32
    %c0_i32_0 = arith.constant 0 : i32
    %c0_i32_1 = arith.constant 0 : i32
    return %c0_i32, %c0_i32_0 : i32, i32
  }
  func.func @transform_9(%arg0: i32, %arg1: i32) -> (i32, i32) {
    %c0_i32 = arith.constant 0 : i32
    %c0_i32_0 = arith.constant 0 : i32
    %c0_i32_1 = arith.constant 0 : i32
    return %c0_i32, %c0_i32_0 : i32, i32
  }
  func.func @transform_10(%arg0: i32, %arg1: i32) -> (i32, i32) {
    %c0_i32 = arith.constant 0 : i32
    %c0_i32_0 = arith.constant 0 : i32
    %c0_i32_1 = arith.constant 0 : i32
    return %c0_i32, %c0_i32_0 : i32, i32
  }
  func.func @transform_11(%arg0: i32, %arg1: i32) -> (i32, i32) {
    %c0_i32 = arith.constant 0 : i32
    %c0_i32_0 = arith.constant 0 : i32
    %c0_i32_1 = arith.constant 0 : i32
    return %c0_i32, %c0_i32_0 : i32, i32
  }
  func.func @transform_12(%arg0: i32, %arg1: i32) -> (i32, i32, i32, i32) {
    %c0_i32 = arith.constant 0 : i32
    %c0_i32_0 = arith.constant 0 : i32
    %c0_i32_1 = arith.constant 0 : i32
    return %arg0, %arg1, %c0_i32, %c0_i32_0 : i32, i32, i32, i32
  }
}

</mosaic_0001>

<llo_original>
// kernel: res_correction_forward_nhwc.1
$region0: #{res_correction_forward_nhwc.1}
  #allocation0 [shape = 'u32[]', space=smem, size = 0x4, offset = 0x4, fixed_abs, tag = 'smem constant byte address 0x4 - core index']
  #allocation1 [shape = 'u32[72,128]{1,0:T(1,128)}', space=vmem, size = 0x9000, scoped, tag = 'internal scratch']
  #allocation2 [shape = 'f32[16,16]{1,0:T(8,128)}', space=vmem, size = 0x2000, scoped, tag = 'scratch operand']
  #allocation3 [shape = 'f32[16,16]{1,0:T(8,128)}', space=vmem, size = 0x2000, scoped, tag = 'scratch operand']
  #allocation4 [shape = 'f32[16,16]{1,0:T(8,128)}', space=vmem, size = 0x2000, scoped, tag = 'scratch operand']
  #allocation5 [shape = 'f32[16,16]{1,0:T(8,128)}', space=vmem, size = 0x2000, scoped, tag = 'scratch operand']
  #allocation6 [shape = 's32[4]{0}', space=sflag, size = 0x10, scoped, tag = 'scratch operand']
  #allocation7 [shape = 's32[]', space=sflag, size = 0x4, offset = 0, fixed_abs, tag = 'sflag constant byte address 0x0 - dummy sync flag']
  #allocation8 [shape = 's32[]', space=sflag, size = 0x4, offset = 0, fixed_abs, tag = 'sflag constant byte address 0x0 - dummy sync flag']
  #allocation9 [shape = 's32[]', space=sflag, size = 0x4, offset = 0, fixed_abs, tag = 'sflag constant byte address 0x0 - dummy sync flag']
  #allocation10 [shape = 's32[]', space=sflag, size = 0x4, offset = 0, fixed_abs, tag = 'sflag constant byte address 0x0 - dummy sync flag']
  %s0 = inlined_call_operand.vmem [shape: f32[2,16,16,16], index: 0, kind: input, shape index: {}, may-alias: {0,2}]
  %s1 = inlined_call_operand.vmem [shape: f32[2,16,16,16], index: 1, kind: input, shape index: {}, may-alias: {1,3}]
  %s2 = inlined_call_operand.vmem [shape: f32[32,16,16], index: 2, kind: input, shape index: {}, may-alias: {0,2}]
  %s3 = inlined_call_operand.vmem [shape: f32[32,16,16], index: 3, kind: input, shape index: {}, may-alias: {1,3}]
  %s4 = inlined_call_operand.vmem [shape: f32[128,128], index: 4, kind: input, shape index: {}]
  %s5 = inlined_call_operand.vmem [shape: f32[1,128], index: 5, kind: input, shape index: {}]
  %s6 = inlined_call_operand.vmem [shape: f32[3,384,128], index: 6, kind: input, shape index: {}]
  %s7 = inlined_call_operand.vmem [shape: f32[1,128], index: 7, kind: input, shape index: {}]
  %s8 = inlined_call_operand.vmem [shape: f32[128,128], index: 8, kind: input, shape index: {}]
  %s9 = inlined_call_operand.vmem [shape: f32[1,128], index: 9, kind: input, shape index: {}]
  %s10 = inlined_call_operand.vmem [shape: f32[128,8], index: 10, kind: input, shape index: {}]
  %s11 = inlined_call_operand.vmem [shape: f32[1,8], index: 11, kind: input, shape index: {}]
  %s12 = inlined_call_operand.vmem [shape: f32[2,16,16,8], index: 12, kind: output, shape index: {}]
  %s13 = sld [smem:[#allocation0]]
  $region149: #{res_correction_forward_nhwc.1} parent=0
    _
  %s15 = ssub.s32 1, %s13
  %s16 = scalar_select 0, %s15, %s13
  loop: start=0, step=1, limit=6
  $region2: #{res_correction_forward_nhwc.1} parent=0 // loop_pre_header
    _
  $region3: #{res_correction_forward_nhwc.1} parent=0 // loop_header
    %s18 = sphi 0, %s22
    %p19 = scmp.ge.s32.totalorder %s18, 6
    %s25 = sphi 0, %s37
    %s26 = sphi 0, %s33
    %s27 = sphi 0, %s25
    %s28 = sphi 0, %s26
    %s29 = sphi 0, %s27
    %s30 = sphi 0, %s28
    %s42 = sphi 0, %s44
    %s45 = sphi 0, %s42
    %s46 = sphi 0, %s45
    %s62 = sphi 0, %s46
    %s70 = sphi 0, %s72
    %s73 = sphi 0, %s70
    %s74 = sphi 0, %s73
    %s90 = sphi 0, %s74
    %s94 = sphi 0, %s94
    %s96 = sphi 0, %s94
    %s97 = sphi 0, %s96
    %s111 = sphi 0, %s97
    %s115 = sphi 0, %s115
    %s117 = sphi 0, %s115
    %s118 = sphi 0, %s117
    %s132 = sphi 0, %s118
    %s136 = sphi 0, %s136
    %s138 = sphi 0, %s136
    %s139 = sphi 0, %s138
    %s153 = sphi 0, %s139
    %s157 = sphi 0, %s157
    %s159 = sphi 0, %s157
    %s160 = sphi 0, %s159
    %s174 = sphi 0, %s160
    %s178 = sphi 0, %s178
    %s180 = sphi 0, %s178
    %s181 = sphi 0, %s180
    %s195 = sphi 0, %s181
    %s199 = sphi 0, %s199
    %s201 = sphi 0, %s199
    %s202 = sphi 0, %s201
    %s216 = sphi 0, %s202
    %s220 = sphi 0, %s220
    %s222 = sphi 0, %s220
    %s223 = sphi 0, %s222
    %s237 = sphi 0, %s223
    %s241 = sphi 0, %s241
    %s243 = sphi 0, %s241
    %s244 = sphi 0, %s243
    %s258 = sphi 0, %s244
    %s266 = sphi 0, %s268
    %s269 = sphi 0, %s266
    %s270 = sphi 0, %s269
    %s286 = sphi 0, %s270
  $region4: #{res_correction_forward_nhwc.1} parent=0 // loop_header_branch
    %21 = sbr.rel (%p19) target = $region8
  $region5: #{res_correction_forward_nhwc.1} parent=0 // loop_body
    %s23 = ssub.s32 %s18, 1
    %s24 = ssub.s32 %s18, 2
    %s31 = sadd.s32 1, %s26
    %p32 = scmp.ge.s32.totalorder %s31, 2
    %s33 = scalar_select %p32, 0, %s31
    %s34 = sadd.s32 1, %s25
    %s35 = scalar_select %p32, %s34, %s25
    %p36 = scmp.ge.s32.totalorder %s35, 2
    %s37 = scalar_select %p36, 0, %s35
    %s38 = ssub.s32 %s25, %s37
    %s39 = ssub.s32 %s26, %s33
    %s40 = sor.u32 %s38, %s39
    %p41 = scmp.eq.s32.totalorder %s40, 0
    %s43 = sadd.s32 %s42, 1
    %s44 = scalar_select %p41, %s42, %s43
    %p47 = pneg %p41
    %p48 = scmp.eq.s32.totalorder %s18, 3
    %p49 = por %p47, %p48
    %p50 = scmp.ne.s32.totalorder %s42, %s45
    %p51 = scmp.eq.s32.totalorder %s18, 0
    %p52 = por %p50, %p51
    %p53 = scmp.ne.s32.totalorder %s42, %s45
    %p54 = scmp.eq.s32.totalorder %s23, 3
    %p55 = por %p53, %p54
    %p56 = scmp.ne.s32.totalorder %s45, %s46
    %p57 = scmp.eq.s32.totalorder %s23, 0
    %p58 = por %p56, %p57
    %p59 = scmp.ne.s32.totalorder %s45, %s46
    %p60 = scmp.eq.s32.totalorder %s24, 3
    %p61 = por %p59, %p60
    %p63 = scmp.ne.s32.totalorder %s46, %s62
    %p64 = scmp.eq.s32.totalorder %s24, 0
    %p65 = por %p63, %p64
    %s66 = ssub.s32 %s25, %s37
    %s67 = ssub.s32 %s26, %s33
    %s68 = sor.u32 %s66, %s67
    %p69 = scmp.eq.s32.totalorder %s68, 0
    %s71 = sadd.s32 %s70, 1
    %s72 = scalar_select %p69, %s70, %s71
    %p75 = pneg %p69
    %p76 = scmp.eq.s32.totalorder %s18, 3
    %p77 = por %p75, %p76
    %p78 = scmp.ne.s32.totalorder %s70, %s73
    %p79 = scmp.eq.s32.totalorder %s18, 0
    %p80 = por %p78, %p79
    %p81 = scmp.ne.s32.totalorder %s70, %s73
    %p82 = scmp.eq.s32.totalorder %s23, 3
    %p83 = por %p81, %p82
    %p84 = scmp.ne.s32.totalorder %s73, %s74
    %p85 = scmp.eq.s32.totalorder %s23, 0
    %p86 = por %p84, %p85
    %p87 = scmp.ne.s32.totalorder %s73, %s74
    %p88 = scmp.eq.s32.totalorder %s24, 3
    %p89 = por %p87, %p88
    %p91 = scmp.ne.s32.totalorder %s74, %s90
    %p92 = scmp.eq.s32.totalorder %s24, 0
    %p93 = por %p91, %p92
    %s95 = sadd.s32 %s94, 1
    %p98 = scmp.eq.s32.totalorder %s18, 3
    %p99 = scmp.ne.s32.totalorder %s94, %s96
    %p100 = scmp.eq.s32.totalorder %s18, 0
    %p101 = por %p99, %p100
    %p102 = scmp.ne.s32.totalorder %s94, %s96
    %p103 = scmp.eq.s32.totalorder %s23, 3
    %p104 = por %p102, %p103
    %p105 = scmp.ne.s32.totalorder %s96, %s97
    %p106 = scmp.eq.s32.totalorder %s23, 0
    %p107 = por %p105, %p106
    %p108 = scmp.ne.s32.totalorder %s96, %s97
    %p109 = scmp.eq.s32.totalorder %s24, 3
    %p110 = por %p108, %p109
    %p112 = scmp.ne.s32.totalorder %s97, %s111
    %p113 = scmp.eq.s32.totalorder %s24, 0
    %p114 = por %p112, %p113
    %s116 = sadd.s32 %s115, 1
    %p119 = scmp.eq.s32.totalorder %s18, 3
    %p120 = scmp.ne.s32.totalorder %s115, %s117
    %p121 = scmp.eq.s32.totalorder %s18, 0
    %p122 = por %p120, %p121
    %p123 = scmp.ne.s32.totalorder %s115, %s117
    %p124 = scmp.eq.s32.totalorder %s23, 3
    %p125 = por %p123, %p124
    %p126 = scmp.ne.s32.totalorder %s117, %s118
    %p127 = scmp.eq.s32.totalorder %s23, 0
    %p128 = por %p126, %p127
    %p129 = scmp.ne.s32.totalorder %s117, %s118
    %p130 = scmp.eq.s32.totalorder %s24, 3
    %p131 = por %p129, %p130
    %p133 = scmp.ne.s32.totalorder %s118, %s132
    %p134 = scmp.eq.s32.totalorder %s24, 0
    %p135 = por %p133, %p134
    %s137 = sadd.s32 %s136, 1
    %p140 = scmp.eq.s32.totalorder %s18, 3
    %p141 = scmp.ne.s32.totalorder %s136, %s138
    %p142 = scmp.eq.s32.totalorder %s18, 0
    %p143 = por %p141, %p142
    %p144 = scmp.ne.s32.totalorder %s136, %s138
    %p145 = scmp.eq.s32.totalorder %s23, 3
    %p146 = por %p144, %p145
    %p147 = scmp.ne.s32.totalorder %s138, %s139
    %p148 = scmp.eq.s32.totalorder %s23, 0
    %p149 = por %p147, %p148
    %p150 = scmp.ne.s32.totalorder %s138, %s139
    %p151 = scmp.eq.s32.totalorder %s24, 3
    %p152 = por %p150, %p151
    %p154 = scmp.ne.s32.totalorder %s139, %s153
    %p155 = scmp.eq.s32.totalorder %s24, 0
    %p156 = por %p154, %p155
    %s158 = sadd.s32 %s157, 1
    %p161 = scmp.eq.s32.totalorder %s18, 3
    %p162 = scmp.ne.s32.totalorder %s157, %s159
    %p163 = scmp.eq.s32.totalorder %s18, 0
    %p164 = por %p162, %p163
    %p165 = scmp.ne.s32.totalorder %s157, %s159
    %p166 = scmp.eq.s32.totalorder %s23, 3
    %p167 = por %p165, %p166
    %p168 = scmp.ne.s32.totalorder %s159, %s160
    %p169 = scmp.eq.s32.totalorder %s23, 0
    %p170 = por %p168, %p169
    %p171 = scmp.ne.s32.totalorder %s159, %s160
    %p172 = scmp.eq.s32.totalorder %s24, 3
    %p173 = por %p171, %p172
    %p175 = scmp.ne.s32.totalorder %s160, %s174
    %p176 = scmp.eq.s32.totalorder %s24, 0
    %p177 = por %p175, %p176
    %s179 = sadd.s32 %s178, 1
    %p182 = scmp.eq.s32.totalorder %s18, 3
    %p183 = scmp.ne.s32.totalorder %s178, %s180
    %p184 = scmp.eq.s32.totalorder %s18, 0
    %p185 = por %p183, %p184
    %p186 = scmp.ne.s32.totalorder %s178, %s180
    %p187 = scmp.eq.s32.totalorder %s23, 3
    %p188 = por %p186, %p187
    %p189 = scmp.ne.s32.totalorder %s180, %s181
    %p190 = scmp.eq.s32.totalorder %s23, 0
    %p191 = por %p189, %p190
    %p192 = scmp.ne.s32.totalorder %s180, %s181
    %p193 = scmp.eq.s32.totalorder %s24, 3
    %p194 = por %p192, %p193
    %p196 = scmp.ne.s32.totalorder %s181, %s195
    %p197 = scmp.eq.s32.totalorder %s24, 0
    %p198 = por %p196, %p197
    %s200 = sadd.s32 %s199, 1
    %p203 = scmp.eq.s32.totalorder %s18, 3
    %p204 = scmp.ne.s32.totalorder %s199, %s201
    %p205 = scmp.eq.s32.totalorder %s18, 0
    %p206 = por %p204, %p205
    %p207 = scmp.ne.s32.totalorder %s199, %s201
    %p208 = scmp.eq.s32.totalorder %s23, 3
    %p209 = por %p207, %p208
    %p210 = scmp.ne.s32.totalorder %s201, %s202
    %p211 = scmp.eq.s32.totalorder %s23, 0
    %p212 = por %p210, %p211
    %p213 = scmp.ne.s32.totalorder %s201, %s202
    %p214 = scmp.eq.s32.totalorder %s24, 3
    %p215 = por %p213, %p214
    %p217 = scmp.ne.s32.totalorder %s202, %s216
    %p218 = scmp.eq.s32.totalorder %s24, 0
    %p219 = por %p217, %p218
    %s221 = sadd.s32 %s220, 1
    %p224 = scmp.eq.s32.totalorder %s18, 3
    %p225 = scmp.ne.s32.totalorder %s220, %s222
    %p226 = scmp.eq.s32.totalorder %s18, 0
    %p227 = por %p225, %p226
    %p228 = scmp.ne.s32.totalorder %s220, %s222
    %p229 = scmp.eq.s32.totalorder %s23, 3
    %p230 = por %p228, %p229
    %p231 = scmp.ne.s32.totalorder %s222, %s223
    %p232 = scmp.eq.s32.totalorder %s23, 0
    %p233 = por %p231, %p232
    %p234 = scmp.ne.s32.totalorder %s222, %s223
    %p235 = scmp.eq.s32.totalorder %s24, 3
    %p236 = por %p234, %p235
    %p238 = scmp.ne.s32.totalorder %s223, %s237
    %p239 = scmp.eq.s32.totalorder %s24, 0
    %p240 = por %p238, %p239
    %s242 = sadd.s32 %s241, 1
    %p245 = scmp.eq.s32.totalorder %s18, 3
    %p246 = scmp.ne.s32.totalorder %s241, %s243
    %p247 = scmp.eq.s32.totalorder %s18, 0
    %p248 = por %p246, %p247
    %p249 = scmp.ne.s32.totalorder %s241, %s243
    %p250 = scmp.eq.s32.totalorder %s23, 3
    %p251 = por %p249, %p250
    %p252 = scmp.ne.s32.totalorder %s243, %s244
    %p253 = scmp.eq.s32.totalorder %s23, 0
    %p254 = por %p252, %p253
    %p255 = scmp.ne.s32.totalorder %s243, %s244
    %p256 = scmp.eq.s32.totalorder %s24, 3
    %p257 = por %p255, %p256
    %p259 = scmp.ne.s32.totalorder %s244, %s258
    %p260 = scmp.eq.s32.totalorder %s24, 0
    %p261 = por %p259, %p260
    %s262 = ssub.s32 %s25, %s37
    %s263 = ssub.s32 %s26, %s33
    %s264 = sor.u32 %s262, %s263
    %p265 = scmp.eq.s32.totalorder %s264, 0
    %s267 = sadd.s32 %s266, 1
    %s268 = scalar_select %p265, %s266, %s267
    %p271 = pneg %p265
    %p272 = scmp.eq.s32.totalorder %s18, 3
    %p273 = por %p271, %p272
    %p274 = scmp.ne.s32.totalorder %s266, %s269
    %p275 = scmp.eq.s32.totalorder %s18, 0
    %p276 = por %p274, %p275
    %p277 = scmp.ne.s32.totalorder %s266, %s269
    %p278 = scmp.eq.s32.totalorder %s23, 3
    %p279 = por %p277, %p278
    %p280 = scmp.ne.s32.totalorder %s269, %s270
    %p281 = scmp.eq.s32.totalorder %s23, 0
    %p282 = por %p280, %p281
    %p283 = scmp.ne.s32.totalorder %s269, %s270
    %p284 = scmp.eq.s32.totalorder %s24, 3
    %p285 = por %p283, %p284
    %p287 = scmp.ne.s32.totalorder %s270, %s286
    %p288 = scmp.eq.s32.totalorder %s24, 0
    %p289 = por %p287, %p288
    %p290 = scmp.le.s32.totalorder 1, %s18
    %p291 = scmp.lt.s32.totalorder %s18, 5
    %p292 = pnand %p290, %p291
    %p293 = pneg %p292
    // Predicated region
    $region9: #{res_correction_forward_nhwc.1} parent=5 // pred_check
      _
    $region10: #{res_correction_forward_nhwc.1} parent=5 // pred_check_branch
      %295 = sbr.rel (%p292) target = $region12
    $region11: #{res_correction_forward_nhwc.1} parent=5 // pred_region
      %s296 = ssub.s32 %s18, 1
      // Predicated region
      $region13: #{res_correction_forward_nhwc.1} parent=11 // pred_check
        %p297 = pneg %p107
      $region14: #{res_correction_forward_nhwc.1} parent=11 // pred_check_branch
        %299 = sbr.rel (%p297) target = $region16
      $region15: #{res_correction_forward_nhwc.1} parent=11 // pred_region
        _
      $region16: #{res_correction_forward_nhwc.1} parent=11 // pred_fallthru
        _
      // Predicated region
      $region17: #{res_correction_forward_nhwc.1} parent=11 // pred_check
        %p300 = pneg %p128
      $region18: #{res_correction_forward_nhwc.1} parent=11 // pred_check_branch
        %302 = sbr.rel (%p300) target = $region20
      $region19: #{res_correction_forward_nhwc.1} parent=11 // pred_region
        _
      $region20: #{res_correction_forward_nhwc.1} parent=11 // pred_fallthru
        _
      // Predicated region
      $region21: #{res_correction_forward_nhwc.1} parent=11 // pred_check
        %p303 = pneg %p149
      $region22: #{res_correction_forward_nhwc.1} parent=11 // pred_check_branch
        %305 = sbr.rel (%p303) target = $region24
      $region23: #{res_correction_forward_nhwc.1} parent=11 // pred_region
        _
      $region24: #{res_correction_forward_nhwc.1} parent=11 // pred_fallthru
        _
      // Predicated region
      $region25: #{res_correction_forward_nhwc.1} parent=11 // pred_check
        %p306 = pneg %p170
      $region26: #{res_correction_forward_nhwc.1} parent=11 // pred_check_branch
        %308 = sbr.rel (%p306) target = $region28
      $region27: #{res_correction_forward_nhwc.1} parent=11 // pred_region
        _
      $region28: #{res_correction_forward_nhwc.1} parent=11 // pred_fallthru
        _
      // Predicated region
      $region29: #{res_correction_forward_nhwc.1} parent=11 // pred_check
        %p309 = pneg %p191
      $region30: #{res_correction_forward_nhwc.1} parent=11 // pred_check_branch
        %311 = sbr.rel (%p309) target = $region32
      $region31: #{res_correction_forward_nhwc.1} parent=11 // pred_region
        _
      $region32: #{res_correction_forward_nhwc.1} parent=11 // pred_fallthru
        _
      // Predicated region
      $region33: #{res_correction_forward_nhwc.1} parent=11 // pred_check
        %p312 = pneg %p212
      $region34: #{res_correction_forward_nhwc.1} parent=11 // pred_check_branch
        %314 = sbr.rel (%p312) target = $region36
      $region35: #{res_correction_forward_nhwc.1} parent=11 // pred_region
        _
      $region36: #{res_correction_forward_nhwc.1} parent=11 // pred_fallthru
        _
      // Predicated region
      $region37: #{res_correction_forward_nhwc.1} parent=11 // pred_check
        %p315 = pneg %p233
      $region38: #{res_correction_forward_nhwc.1} parent=11 // pred_check_branch
        %317 = sbr.rel (%p315) target = $region40
      $region39: #{res_correction_forward_nhwc.1} parent=11 // pred_region
        _
      $region40: #{res_correction_forward_nhwc.1} parent=11 // pred_fallthru
        _
      // Predicated region
      $region41: #{res_correction_forward_nhwc.1} parent=11 // pred_check
        %p318 = pneg %p254
      $region42: #{res_correction_forward_nhwc.1} parent=11 // pred_check_branch
        %320 = sbr.rel (%p318) target = $region44
      $region43: #{res_correction_forward_nhwc.1} parent=11 // pred_region
        _
      $region44: #{res_correction_forward_nhwc.1} parent=11 // pred_fallthru
        _
    $region12: #{res_correction_forward_nhwc.1} parent=5 // pred_fallthru
      _
    %p321 = scmp.lt.s32.totalorder %s18, 4
    // Predicated region
    $region45: #{res_correction_forward_nhwc.1} parent=5 // pred_check
      %p322 = pneg %p321
    $region46: #{res_correction_forward_nhwc.1} parent=5 // pred_check_branch
      %324 = sbr.rel (%p322) target = $region48
    $region47: #{res_correction_forward_nhwc.1} parent=5 // pred_region
      // Predicated region
      $region49: #{res_correction_forward_nhwc.1} parent=47 // pred_check
        %p325 = pneg %p52
      $region50: #{res_correction_forward_nhwc.1} parent=47 // pred_check_branch
        %327 = sbr.rel (%p325) target = $region52
      $region51: #{res_correction_forward_nhwc.1} parent=47 // pred_region
        %s328 = smul.u32 8, %s26
        %p329 = scmp.lt.s32.totalorder %s25, 1
        %s330 = scalar_select %p329, %s25, 1
        %p331 = scmp.lt.s32.totalorder %s328, 15
        %s332 = scalar_select %p331, %s328, 15
        %s333 = smul.addr %s332, 2
        %s334 = smul.addr %s330, 32
        %s335 = sadd.s32 %s333, %s334
        %s336 = smul.addr %s335, 8
        %s337 = scalar_lea.vmem %s0, %s336
        %s338 = smul.u32 8, %s26
      $region52: #{res_correction_forward_nhwc.1} parent=47 // pred_fallthru
        _
      // Predicated region
      $region53: #{res_correction_forward_nhwc.1} parent=47 // pred_check
        %p339 = pneg %p80
      $region54: #{res_correction_forward_nhwc.1} parent=47 // pred_check_branch
        %341 = sbr.rel (%p339) target = $region56
      $region55: #{res_correction_forward_nhwc.1} parent=47 // pred_region
        %s342 = smul.u32 8, %s26
        %p343 = scmp.lt.s32.totalorder %s25, 1
        %s344 = scalar_select %p343, %s25, 1
        %p345 = scmp.lt.s32.totalorder %s342, 15
        %s346 = scalar_select %p345, %s342, 15
        %s347 = smul.addr %s346, 2
        %s348 = smul.addr %s344, 32
        %s349 = sadd.s32 %s347, %s348
        %s350 = smul.addr %s349, 8
        %s351 = scalar_lea.vmem %s1, %s350
        %s352 = smul.u32 8, %s26
      $region56: #{res_correction_forward_nhwc.1} parent=47 // pred_fallthru
        _
    $region48: #{res_correction_forward_nhwc.1} parent=5 // pred_fallthru
      _
    %p353 = scmp.le.s32.totalorder 1, %s18
    %p354 = scmp.lt.s32.totalorder %s18, 5
    %p355 = pnand %p353, %p354
    %p356 = pneg %p355
    // Predicated region
    $region57: #{res_correction_forward_nhwc.1} parent=5 // pred_check
      _
    $region58: #{res_correction_forward_nhwc.1} parent=5 // pred_check_branch
      %358 = sbr.rel (%p355) target = $region60
    $region59: #{res_correction_forward_nhwc.1} parent=5 // pred_region
      %s359 = ssub.s32 %s18, 1
      %s360 = smul.u32 8, %s28
      %p361 = scmp.lt.s32.totalorder %s27, 1
      %s362 = scalar_select %p361, %s27, 1
      %p363 = scmp.lt.s32.totalorder %s360, 15
      %s364 = scalar_select %p363, %s360, 15
      %s365 = smul.addr %s364, 2
      %s366 = smul.addr %s362, 32
      %s367 = sadd.s32 %s365, %s366
      %s368 = smul.addr %s367, 8
      %s369 = scalar_lea.vmem %s0, %s368
      %p370 = pneg %p58
      %p371 = pneg %p55
      %s372 = smul.u32 8, %s28
      %p373 = scmp.lt.s32.totalorder %s27, 1
      %s374 = scalar_select %p373, %s27, 1
      %p375 = scmp.lt.s32.totalorder %s372, 15
      %s376 = scalar_select %p375, %s372, 15
      %s377 = smul.addr %s376, 2
      %s378 = smul.addr %s374, 32
      %s379 = sadd.s32 %s377, %s378
      %s380 = smul.addr %s379, 8
      %s381 = scalar_lea.vmem %s1, %s380
      %p382 = pneg %p86
      %p383 = pneg %p83
      %p384 = pneg %p107
      %p385 = pneg %p104
      %p386 = pneg %p128
      %p387 = pneg %p125
      %p388 = pneg %p149
      %p389 = pneg %p146
      %p390 = pneg %p170
      %p391 = pneg %p167
      %p392 = pneg %p191
      %p393 = pneg %p188
      %p394 = pneg %p212
      %p395 = pneg %p209
      %p396 = pneg %p233
      %p397 = pneg %p230
      %p398 = pneg %p254
      %p399 = pneg %p251
      %p400 = pneg %p282
      %p401 = pneg %p279
      %s402 = smul.u32 8, %s28
      %p403 = scmp.lt.s32.totalorder %s27, 1
      %s404 = scalar_select %p403, %s27, 1
      %p405 = scmp.lt.s32.totalorder %s402, 15
      %s406 = scalar_select %p405, %s402, 15
      %s407 = smul.addr %s406, 2
      %s408 = smul.addr %s404, 32
      %s409 = sadd.s32 %s407, %s408
      %s410 = smul.addr %s409, 8
      %s411 = scalar_lea.vmem %s12, %s410
      %s412 = smul.u32 8, %s28
      %p413 = scmp.lt.s32.totalorder %s27, 1
      %s414 = scalar_select %p413, %s27, 1
      %p415 = scmp.lt.s32.totalorder %s412, 15
      %s416 = scalar_select %p415, %s412, 15
      %s417 = smul.addr %s416, 2
      %s418 = smul.addr %s414, 32
      %s419 = sadd.s32 %s417, %s418
      %s420 = smul.addr %s419, 8
      %s421 = scalar_lea.vmem %s0, %s420
      %s422 = smul.u32 8, %s28
      %s423 = smul.u32 8, %s28
      %p424 = scmp.lt.s32.totalorder %s27, 1
      %s425 = scalar_select %p424, %s27, 1
      %p426 = scmp.lt.s32.totalorder %s423, 15
      %s427 = scalar_select %p426, %s423, 15
      %s428 = smul.addr %s427, 2
      %s429 = smul.addr %s425, 32
      %s430 = sadd.s32 %s428, %s429
      %s431 = smul.addr %s430, 8
      %s432 = scalar_lea.vmem %s1, %s431
      %s433 = smul.u32 8, %s28
      %s434 = smul.u32 8, %s28
      %p435 = scmp.lt.s32.totalorder %s27, 1
      %s436 = scalar_select %p435, %s27, 1
      %p437 = scmp.lt.s32.totalorder %s434, 15
      %s438 = scalar_select %p437, %s434, 15
      %s439 = smul.addr %s438, 2
      %s440 = smul.addr %s436, 32
      %s441 = sadd.s32 %s439, %s440
      %s442 = smul.addr %s441, 8
      %s443 = scalar_lea.vmem %s12, %s442
      %s444 = smul.u32 8, %s28
      %s445 = smul.u32 %s28, 8
      %s446 = smul.u32 %s27, 16
      %s447 = ssub.s32 %s445, 1
      %p448 = scmp.gt.s32.totalorder %s447, 0
      %s449 = scalar_select %p448, %s447, 0
      %s450 = sadd.s32 %s446, %s449
      %s451 = sadd.s32 %s445, 8
      %p452 = scmp.lt.s32.totalorder %s451, 15
      %s453 = scalar_select %p452, %s451, 15
      %s454 = sadd.s32 %s446, %s453
      %s455 = smul.u32 %s450, 16
      %s456 = scalar_lea.vmem %s2, %s455
      // Predicated region
      $region61: #{res_correction_forward_nhwc.1} parent=59 // pred_check
        _
      $region62: #{res_correction_forward_nhwc.1} parent=59 // pred_check_branch
        %458 = sbr.rel (0) target = $region64
      $region63: #{res_correction_forward_nhwc.1} parent=59 // pred_region
        loop: start=0, step=1, limit=1
        $region65: #{res_correction_forward_nhwc.1} parent=63 // loop_pre_header
          _
        $region66: #{res_correction_forward_nhwc.1} parent=63 // loop_header
          %s460 = sphi 0, %s464
          %p461 = scmp.ge.s32.totalorder %s460, 1
          %s465 = sphi %s456, %s456
          %s466 = sphi [#allocation2], [#allocation2]
        $region67: #{res_correction_forward_nhwc.1} parent=63 // loop_header_branch
          %463 = sbr.rel (%p461) target = $region71
        $region68: #{res_correction_forward_nhwc.1} parent=63 // loop_body
          %v467 = vld [vmem:[%s465] sm:$0xff]
          %468 = vst [vmem:[%s466] sm:$0xff] %v467
          %v469 = vld [vmem:[%s465 + $0x8] sm:$0xff]
          %470 = vst [vmem:[%s466 + $0x8] sm:$0xff] %v469
        $region69: #{res_correction_forward_nhwc.1} parent=63 // loop_footer
          %s464 = sadd.s32 1, %s460
        $region70: #{res_correction_forward_nhwc.1} parent=63 // loop_footer_branch
          %459 = sbr.rel target = $region66
        $region71: #{res_correction_forward_nhwc.1} parent=63 // loop_exit
          _
      $region64: #{res_correction_forward_nhwc.1} parent=59 // pred_fallthru
        _
      // Predicated region
      $region72: #{res_correction_forward_nhwc.1} parent=59 // pred_check
        _
      $region73: #{res_correction_forward_nhwc.1} parent=59 // pred_check_branch
        %472 = sbr.rel target = $region75
      $region74: #{res_correction_forward_nhwc.1} parent=59 // pred_region
        _
      $region75: #{res_correction_forward_nhwc.1} parent=59 // pred_fallthru
        _
      // Predicated region
      $region76: #{res_correction_forward_nhwc.1} parent=59 // pred_check
        _
      $region77: #{res_correction_forward_nhwc.1} parent=59 // pred_check_branch
        %475 = sbr.rel (0) target = $region79
      $region78: #{res_correction_forward_nhwc.1} parent=59 // pred_region
        %476 = vsyncadd [#allocation6], 256
      $region79: #{res_correction_forward_nhwc.1} parent=59 // pred_fallthru
        _
      %s477 = scalar_lea.vmem %s3, %s455
      %s478 = scalar_lea.sflag [#allocation6], 1
      // Predicated region
      $region80: #{res_correction_forward_nhwc.1} parent=59 // pred_check
        _
      $region81: #{res_correction_forward_nhwc.1} parent=59 // pred_check_branch
        %480 = sbr.rel (0) target = $region83
      $region82: #{res_correction_forward_nhwc.1} parent=59 // pred_region
        loop: start=0, step=1, limit=1
        $region84: #{res_correction_forward_nhwc.1} parent=82 // loop_pre_header
          _
        $region85: #{res_correction_forward_nhwc.1} parent=82 // loop_header
          %s482 = sphi 0, %s486
          %p483 = scmp.ge.s32.totalorder %s482, 1
          %s487 = sphi %s477, %s477
          %s488 = sphi [#allocation4], [#allocation4]
        $region86: #{res_correction_forward_nhwc.1} parent=82 // loop_header_branch
          %485 = sbr.rel (%p483) target = $region90
        $region87: #{res_correction_forward_nhwc.1} parent=82 // loop_body
          %v489 = vld [vmem:[%s487] sm:$0xff]
          %490 = vst [vmem:[%s488] sm:$0xff] %v489
          %v491 = vld [vmem:[%s487 + $0x8] sm:$0xff]
          %492 = vst [vmem:[%s488 + $0x8] sm:$0xff] %v491
        $region88: #{res_correction_forward_nhwc.1} parent=82 // loop_footer
          %s486 = sadd.s32 1, %s482
        $region89: #{res_correction_forward_nhwc.1} parent=82 // loop_footer_branch
          %481 = sbr.rel target = $region85
        $region90: #{res_correction_forward_nhwc.1} parent=82 // loop_exit
          _
      $region83: #{res_correction_forward_nhwc.1} parent=59 // pred_fallthru
        _
      // Predicated region
      $region91: #{res_correction_forward_nhwc.1} parent=59 // pred_check
        _
      $region92: #{res_correction_forward_nhwc.1} parent=59 // pred_check_branch
        %494 = sbr.rel target = $region94
      $region93: #{res_correction_forward_nhwc.1} parent=59 // pred_region
        _
      $region94: #{res_correction_forward_nhwc.1} parent=59 // pred_fallthru
        _
      // Predicated region
      $region95: #{res_correction_forward_nhwc.1} parent=59 // pred_check
        _
      $region96: #{res_correction_forward_nhwc.1} parent=59 // pred_check_branch
        %497 = sbr.rel (0) target = $region98
      $region97: #{res_correction_forward_nhwc.1} parent=59 // pred_region
        %498 = vsyncadd %s478, 256
      $region98: #{res_correction_forward_nhwc.1} parent=59 // pred_fallthru
        _
      %s499 = smul.u32 %s454, 16
      %s500 = scalar_lea.vmem %s2, %s499
      %s501 = scalar_lea.sflag [#allocation6], 2
      // Predicated region
      $region99: #{res_correction_forward_nhwc.1} parent=59 // pred_check
        _
      $region100: #{res_correction_forward_nhwc.1} parent=59 // pred_check_branch
        %503 = sbr.rel (0) target = $region102
      $region101: #{res_correction_forward_nhwc.1} parent=59 // pred_region
        loop: start=0, step=1, limit=1
        $region103: #{res_correction_forward_nhwc.1} parent=101 // loop_pre_header
          _
        $region104: #{res_correction_forward_nhwc.1} parent=101 // loop_header
          %s505 = sphi 0, %s509
          %p506 = scmp.ge.s32.totalorder %s505, 1
          %s510 = sphi %s500, %s500
          %s511 = sphi [#allocation3], [#allocation3]
        $region105: #{res_correction_forward_nhwc.1} parent=101 // loop_header_branch
          %508 = sbr.rel (%p506) target = $region109
        $region106: #{res_correction_forward_nhwc.1} parent=101 // loop_body
          %v512 = vld [vmem:[%s510] sm:$0xff]
          %513 = vst [vmem:[%s511] sm:$0xff] %v512
          %v514 = vld [vmem:[%s510 + $0x8] sm:$0xff]
          %515 = vst [vmem:[%s511 + $0x8] sm:$0xff] %v514
        $region107: #{res_correction_forward_nhwc.1} parent=101 // loop_footer
          %s509 = sadd.s32 1, %s505
        $region108: #{res_correction_forward_nhwc.1} parent=101 // loop_footer_branch
          %504 = sbr.rel target = $region104
        $region109: #{res_correction_forward_nhwc.1} parent=101 // loop_exit
          _
      $region102: #{res_correction_forward_nhwc.1} parent=59 // pred_fallthru
        _
      // Predicated region
      $region110: #{res_correction_forward_nhwc.1} parent=59 // pred_check
        _
      $region111: #{res_correction_forward_nhwc.1} parent=59 // pred_check_branch
        %517 = sbr.rel target = $region113
      $region112: #{res_correction_forward_nhwc.1} parent=59 // pred_region
        _
      $region113: #{res_correction_forward_nhwc.1} parent=59 // pred_fallthru
        _
      // Predicated region
      $region114: #{res_correction_forward_nhwc.1} parent=59 // pred_check
        _
      $region115: #{res_correction_forward_nhwc.1} parent=59 // pred_check_branch
        %520 = sbr.rel (0) target = $region117
      $region116: #{res_correction_forward_nhwc.1} parent=59 // pred_region
        %521 = vsyncadd %s501, 256
      $region117: #{res_correction_forward_nhwc.1} parent=59 // pred_fallthru
        _
      %s522 = scalar_lea.vmem %s3, %s499
      %s523 = scalar_lea.sflag [#allocation6], 3
      // Predicated region
      $region118: #{res_correction_forward_nhwc.1} parent=59 // pred_check
        _
      $region119: #{res_correction_forward_nhwc.1} parent=59 // pred_check_branch
        %525 = sbr.rel (0) target = $region121
      $region120: #{res_correction_forward_nhwc.1} parent=59 // pred_region
        loop: start=0, step=1, limit=1
        $region122: #{res_correction_forward_nhwc.1} parent=120 // loop_pre_header
          _
        $region123: #{res_correction_forward_nhwc.1} parent=120 // loop_header
          %s527 = sphi 0, %s531
          %p528 = scmp.ge.s32.totalorder %s527, 1
          %s532 = sphi %s522, %s522
          %s533 = sphi [#allocation5], [#allocation5]
        $region124: #{res_correction_forward_nhwc.1} parent=120 // loop_header_branch
          %530 = sbr.rel (%p528) target = $region128
        $region125: #{res_correction_forward_nhwc.1} parent=120 // loop_body
          %v534 = vld [vmem:[%s532] sm:$0xff]
          %535 = vst [vmem:[%s533] sm:$0xff] %v534
          %v536 = vld [vmem:[%s532 + $0x8] sm:$0xff]
          %537 = vst [vmem:[%s533 + $0x8] sm:$0xff] %v536
        $region126: #{res_correction_forward_nhwc.1} parent=120 // loop_footer
          %s531 = sadd.s32 1, %s527
        $region127: #{res_correction_forward_nhwc.1} parent=120 // loop_footer_branch
          %526 = sbr.rel target = $region123
        $region128: #{res_correction_forward_nhwc.1} parent=120 // loop_exit
          _
      $region121: #{res_correction_forward_nhwc.1} parent=59 // pred_fallthru
        _
      // Predicated region
      $region129: #{res_correction_forward_nhwc.1} parent=59 // pred_check
        _
      $region130: #{res_correction_forward_nhwc.1} parent=59 // pred_check_branch
        %539 = sbr.rel target = $region132
      $region131: #{res_correction_forward_nhwc.1} parent=59 // pred_region
        _
      $region132: #{res_correction_forward_nhwc.1} parent=59 // pred_fallthru
        _
      // Predicated region
      $region133: #{res_correction_forward_nhwc.1} parent=59 // pred_check
        _
      $region134: #{res_correction_forward_nhwc.1} parent=59 // pred_check_branch
        %542 = sbr.rel (0) target = $region136
      $region135: #{res_correction_forward_nhwc.1} parent=59 // pred_region
        %543 = vsyncadd %s523, 256
      $region136: #{res_correction_forward_nhwc.1} parent=59 // pred_fallthru
        _
      %v544 = vld [vmem:[%s421] sm:$0xff]
      %v545 = vld [vmem:[%s421 + $0x8] sm:$0xff]
      %v546 = vld [vmem:[%s421 + $0x10] sm:$0xff]
      %v547 = vld [vmem:[%s421 + $0x18] sm:$0xff]
      %v548 = vld [vmem:[%s421 + $0x20] sm:$0xff]
      %v549 = vld [vmem:[%s421 + $0x28] sm:$0xff]
      %v550 = vld [vmem:[%s421 + $0x30] sm:$0xff]
      %v551 = vld [vmem:[%s421 + $0x38] sm:$0xff]
      %v552 = vld [vmem:[%s421 + $0x40] sm:$0xff]
      %v553 = vld [vmem:[%s421 + $0x48] sm:$0xff]
      %v554 = vld [vmem:[%s421 + $0x50] sm:$0xff]
      %v555 = vld [vmem:[%s421 + $0x58] sm:$0xff]
      %v556 = vld [vmem:[%s421 + $0x60] sm:$0xff]
      %v557 = vld [vmem:[%s421 + $0x68] sm:$0xff]
      %v558 = vld [vmem:[%s421 + $0x70] sm:$0xff]
      %v559 = vld [vmem:[%s421 + $0x78] sm:$0xff]
      %v560 = vld [vmem:[%s432] sm:$0xff]
      %v561 = vld [vmem:[%s432 + $0x8] sm:$0xff]
      %v562 = vld [vmem:[%s432 + $0x10] sm:$0xff]
      %v563 = vld [vmem:[%s432 + $0x18] sm:$0xff]
      %v564 = vld [vmem:[%s432 + $0x20] sm:$0xff]
      %v565 = vld [vmem:[%s432 + $0x28] sm:$0xff]
      %v566 = vld [vmem:[%s432 + $0x30] sm:$0xff]
      %v567 = vld [vmem:[%s432 + $0x38] sm:$0xff]
      %v568 = vld [vmem:[%s432 + $0x40] sm:$0xff]
      %v569 = vld [vmem:[%s432 + $0x48] sm:$0xff]
      %v570 = vld [vmem:[%s432 + $0x50] sm:$0xff]
      %v571 = vld [vmem:[%s432 + $0x58] sm:$0xff]
      %v572 = vld [vmem:[%s432 + $0x60] sm:$0xff]
      %v573 = vld [vmem:[%s432 + $0x68] sm:$0xff]
      %v574 = vld [vmem:[%s432 + $0x70] sm:$0xff]
      %v575 = vld [vmem:[%s432 + $0x78] sm:$0xff]
      %v576 = vadd.f32 %v544, %v560
      %v577 = vadd.f32 %v545, %v561
      %v578 = vadd.f32 %v546, %v562
      %v579 = vadd.f32 %v547, %v563
      %v580 = vadd.f32 %v548, %v564
      %v581 = vadd.f32 %v549, %v565
      %v582 = vadd.f32 %v550, %v566
      %v583 = vadd.f32 %v551, %v567
      %v584 = vadd.f32 %v552, %v568
      %v585 = vadd.f32 %v553, %v569
      %v586 = vadd.f32 %v554, %v570
      %v587 = vadd.f32 %v555, %v571
      %v588 = vadd.f32 %v556, %v572
      %v589 = vadd.f32 %v557, %v573
      %v590 = vadd.f32 %v558, %v574
      %v591 = vadd.f32 %v559, %v575
      %vm592 = vcmask 130048
      %v593 = vsel %vm592, %v576, 0.0
      %v594 = vsel %vm592, %v577, 0.0
      %v595 = vsel %vm592, %v578, 0.0
      %v596 = vsel %vm592, %v579, 0.0
      %v597 = vsel %vm592, %v580, 0.0
      %v598 = vsel %vm592, %v581, 0.0
      %v599 = vsel %vm592, %v582, 0.0
      %v600 = vsel %vm592, %v583, 0.0
      %v601 = vsel %vm592, %v584, 0.0
      %v602 = vsel %vm592, %v585, 0.0
      %v603 = vsel %vm592, %v586, 0.0
      %v604 = vsel %vm592, %v587, 0.0
      %v605 = vsel %vm592, %v588, 0.0
      %v606 = vsel %vm592, %v589, 0.0
      %v607 = vsel %vm592, %v590, 0.0
      %v608 = vsel %vm592, %v591, 0.0
      %v609 = vld [vmem:[%s4] sm:$0xff]
      %v610 = vld [vmem:[%s4 + $0x8] sm:$0xff]
      %v611 = vld [vmem:[%s4 + $0x10] sm:$0xff]
      %v612 = vld [vmem:[%s4 + $0x18] sm:$0xff]
      %v613 = vld [vmem:[%s4 + $0x20] sm:$0xff]
      %v614 = vld [vmem:[%s4 + $0x28] sm:$0xff]
      %v615 = vld [vmem:[%s4 + $0x30] sm:$0xff]
      %v616 = vld [vmem:[%s4 + $0x38] sm:$0xff]
      %v617 = vld [vmem:[%s4 + $0x40] sm:$0xff]
      %v618 = vld [vmem:[%s4 + $0x48] sm:$0xff]
      %v619 = vld [vmem:[%s4 + $0x50] sm:$0xff]
      %v620 = vld [vmem:[%s4 + $0x58] sm:$0xff]
      %v621 = vld [vmem:[%s4 + $0x60] sm:$0xff]
      %v622 = vld [vmem:[%s4 + $0x68] sm:$0xff]
      %v623 = vld [vmem:[%s4 + $0x70] sm:$0xff]
      %v624 = vld [vmem:[%s4 + $0x78] sm:$0xff]
      %v625 = vld [vmem:[%s5] sm:$0x1]
      %v627 = vperm.slane %v625, 0
      %629 = vmatpush.msra.mxu0 %v624
      %630 = vmatpush.msra.mxu0 %v623
      %631 = vmatpush.msra.mxu0 %v622
      %632 = vmatpush.msra.mxu0 %v621
      %633 = vmatpush.msra.mxu0 %v620
      %634 = vmatpush.msra.mxu0 %v619
      %635 = vmatpush.msra.mxu0 %v618
      %636 = vmatpush.msra.mxu0 %v617
      %637 = vmatpush.msra.mxu0 %v616
      %638 = vmatpush.msra.mxu0 %v615
      %639 = vmatpush.msra.mxu0 %v614
      %640 = vmatpush.msra.mxu0 %v613
      %641 = vmatpush.msra.mxu0 %v612
      %642 = vmatpush.msra.mxu0 %v611
      %643 = vmatpush.msra.mxu0 %v610
      %644 = vmatpush.msra.mxu0 %v609
      %645 = vmatmul.f32.gmra.mxu0 %v593
      %v646 = vpop.f32.mrf.mxu0
      %v647 = vadd.f32 %v627, %v646
      %648 = vmatmul.f32.gmra.mxu0 %v594
      %v649 = vpop.f32.mrf.mxu0
      %v650 = vadd.f32 %v627, %v649
      %651 = vmatmul.f32.gmra.mxu0 %v595
      %v652 = vpop.f32.mrf.mxu0
      %v653 = vadd.f32 %v627, %v652
      %654 = vmatmul.f32.gmra.mxu0 %v596
      %v655 = vpop.f32.mrf.mxu0
      %v656 = vadd.f32 %v627, %v655
      %657 = vmatmul.f32.gmra.mxu0 %v597
      %v658 = vpop.f32.mrf.mxu0
      %v659 = vadd.f32 %v627, %v658
      %660 = vmatmul.f32.gmra.mxu0 %v598
      %v661 = vpop.f32.mrf.mxu0
      %v662 = vadd.f32 %v627, %v661
      %663 = vmatmul.f32.gmra.mxu0 %v599
      %v664 = vpop.f32.mrf.mxu0
      %v665 = vadd.f32 %v627, %v664
      %666 = vmatmul.f32.gmra.mxu0 %v600
      %v667 = vpop.f32.mrf.mxu0
      %v668 = vadd.f32 %v627, %v667
      %669 = vmatmul.f32.gmra.mxu0 %v601
      %v670 = vpop.f32.mrf.mxu0
      %v671 = vadd.f32 %v627, %v670
      %672 = vmatmul.f32.gmra.mxu0 %v602
      %v673 = vpop.f32.mrf.mxu0
      %v674 = vadd.f32 %v627, %v673
      %675 = vmatmul.f32.gmra.mxu0 %v603
      %v676 = vpop.f32.mrf.mxu0
      %v677 = vadd.f32 %v627, %v676
      %678 = vmatmul.f32.gmra.mxu0 %v604
      %v679 = vpop.f32.mrf.mxu0
      %v680 = vadd.f32 %v627, %v679
      %681 = vmatmul.f32.gmra.mxu0 %v605
      %v682 = vpop.f32.mrf.mxu0
      %v683 = vadd.f32 %v627, %v682
      %684 = vmatmul.f32.gmra.mxu0 %v606
      %v685 = vpop.f32.mrf.mxu0
      %v686 = vadd.f32 %v627, %v685
      %687 = vmatmul.f32.gmra.mxu0 %v607
      %v688 = vpop.f32.mrf.mxu0
      %v689 = vadd.f32 %v627, %v688
      %690 = vmatmul.f32.gmra.mxu0 %v608
      %v691 = vpop.f32.mrf.mxu0
      %v692 = vadd.f32 %v627, %v691
      %693 = vdwg.mxu0
      %v694 = vmax.f32 %v647, 0.0
      %v695 = vmax.f32 %v650, 0.0
      %v696 = vmax.f32 %v653, 0.0
      %v697 = vmax.f32 %v656, 0.0
      %v698 = vmax.f32 %v659, 0.0
      %v699 = vmax.f32 %v662, 0.0
      %v700 = vmax.f32 %v665, 0.0
      %v701 = vmax.f32 %v668, 0.0
      %v702 = vmax.f32 %v671, 0.0
      %v703 = vmax.f32 %v674, 0.0
      %v704 = vmax.f32 %v677, 0.0
      %v705 = vmax.f32 %v680, 0.0
      %v706 = vmax.f32 %v683, 0.0
      %v707 = vmax.f32 %v686, 0.0
      %v708 = vmax.f32 %v689, 0.0
      %v709 = vmax.f32 %v692, 0.0
      %s710 = smul.u32 16, 1
      %s711 = sshll.u32 %s710, 4
      %712 = dma.done [#allocation6], %s711
      %s713 = sshll.u32 %s710, 4
      %714 = dma.done %s478, %s713
      %s715 = sshll.u32 %s710, 4
      %716 = dma.done %s501, %s715
      %s717 = sshll.u32 %s710, 4
      %718 = dma.done %s523, %s717
      %v719 = vld [vmem:[#allocation2] sm:$0xff]
      %v720 = vld [vmem:[#allocation2 + $0x8] sm:$0xff]
      %v721 = vld [vmem:[#allocation4] sm:$0xff]
      %v722 = vld [vmem:[#allocation4 + $0x8] sm:$0xff]
      %v723 = vadd.f32 %v719, %v721
      %v724 = vadd.f32 %v720, %v722
      %v725 = vld [vmem:[#allocation3] sm:$0xff]
      %v726 = vld [vmem:[#allocation3 + $0x8] sm:$0xff]
      %v727 = vld [vmem:[#allocation5] sm:$0xff]
      %v728 = vld [vmem:[#allocation5 + $0x8] sm:$0xff]
      %v729 = vadd.f32 %v725, %v727
      %v730 = vadd.f32 %v726, %v728
      %v731 = vsel %vm592, %v723, 0.0
      %v732 = vsel %vm592, %v724, 0.0
      %v733 = vsel %vm592, %v729, 0.0
      %v734 = vsel %vm592, %v730, 0.0
      %v735 = vld [vmem:[%s4] sm:$0xff]
      %v736 = vld [vmem:[%s4 + $0x8] sm:$0xff]
      %v737 = vld [vmem:[%s4 + $0x10] sm:$0xff]
      %v738 = vld [vmem:[%s4 + $0x18] sm:$0xff]
      %v739 = vld [vmem:[%s4 + $0x20] sm:$0xff]
      %v740 = vld [vmem:[%s4 + $0x28] sm:$0xff]
      %v741 = vld [vmem:[%s4 + $0x30] sm:$0xff]
      %v742 = vld [vmem:[%s4 + $0x38] sm:$0xff]
      %v743 = vld [vmem:[%s4 + $0x40] sm:$0xff]
      %v744 = vld [vmem:[%s4 + $0x48] sm:$0xff]
      %v745 = vld [vmem:[%s4 + $0x50] sm:$0xff]
      %v746 = vld [vmem:[%s4 + $0x58] sm:$0xff]
      %v747 = vld [vmem:[%s4 + $0x60] sm:$0xff]
      %v748 = vld [vmem:[%s4 + $0x68] sm:$0xff]
      %v749 = vld [vmem:[%s4 + $0x70] sm:$0xff]
      %v750 = vld [vmem:[%s4 + $0x78] sm:$0xff]
      %v751 = vld [vmem:[%s5] sm:$0x1]
      %v753 = vperm.slane %v751, 0
      %755 = vmatpush.msra.mxu0 %v750
      %756 = vmatpush.msra.mxu0 %v749
      %757 = vmatpush.msra.mxu0 %v748
      %758 = vmatpush.msra.mxu0 %v747
      %759 = vmatpush.msra.mxu0 %v746
      %760 = vmatpush.msra.mxu0 %v745
      %761 = vmatpush.msra.mxu0 %v744
      %762 = vmatpush.msra.mxu0 %v743
      %763 = vmatpush.msra.mxu0 %v742
      %764 = vmatpush.msra.mxu0 %v741
      %765 = vmatpush.msra.mxu0 %v740
      %766 = vmatpush.msra.mxu0 %v739
      %767 = vmatpush.msra.mxu0 %v738
      %768 = vmatpush.msra.mxu0 %v737
      %769 = vmatpush.msra.mxu0 %v736
      %770 = vmatpush.msra.mxu0 %v735
      %771 = vmatmul.f32.gmra.mxu0 %v731
      %v772 = vpop.f32.mrf.mxu0
      %v773 = vadd.f32 %v753, %v772
      %774 = vmatmul.f32.gmra.mxu0 %v732
      %v775 = vpop.f32.mrf.mxu0
      %v776 = vadd.f32 %v753, %v775
      %777 = vmatmul.f32.gmra.mxu0 %v733
      %v778 = vpop.f32.mrf.mxu0
      %v779 = vadd.f32 %v753, %v778
      %780 = vmatmul.f32.gmra.mxu0 %v734
      %v781 = vpop.f32.mrf.mxu0
      %v782 = vadd.f32 %v753, %v781
      %783 = vdwg.mxu0
      %v784 = vmax.f32 %v773, 0.0
      %v785 = vmax.f32 %v776, 0.0
      %v786 = vmax.f32 %v779, 0.0
      %v787 = vmax.f32 %v782, 0.0
      %p788 = scmp.gt.s32.totalorder %s28, 0
      %s789 = scalar_select %p788, 1, 0
      %v790 = vstv %s789
      %vm791 = vcmp.eq.s32.totalorder %v790, 1
      %v792 = vsel %vm791, %v784, 0.0
      %v793 = vsel %vm791, %v785, 0.0
      %p794 = scmp.lt.s32.totalorder %s28, 1
      %s795 = scalar_select %p794, 1, 0
      %v796 = vstv %s795
      %vm797 = vcmp.eq.s32.totalorder %v796, 1
      %v798 = vsel %vm797, %v786, 0.0
      %v799 = vsel %vm797, %v787, 0.0
      %vm820 = vcmask 1040384
      %v821 = vrot.slane %v792, 7
      %v822 = vrot.slane %v793, 7
      %v823 = vsel %vm820, %v821, %v822
      %v824 = vrot.slane %v694, 7
      %v825 = vrot.slane %v695, 7
      %v826 = vsel %vm820, %v824, %v825
      %v827 = vrot.slane %v696, 7
      %v828 = vrot.slane %v697, 7
      %v829 = vsel %vm820, %v827, %v828
      %v830 = vrot.slane %v698, 7
      %v831 = vrot.slane %v699, 7
      %v832 = vsel %vm820, %v830, %v831
      %v833 = vrot.slane %v700, 7
      %v834 = vrot.slane %v701, 7
      %v835 = vsel %vm820, %v833, %v834
      %v836 = vrot.slane %v702, 7
      %v837 = vrot.slane %v703, 7
      %v838 = vsel %vm820, %v836, %v837
      %v839 = vrot.slane %v704, 7
      %v840 = vrot.slane %v705, 7
      %v841 = vsel %vm820, %v839, %v840
      %v842 = vrot.slane %v706, 7
      %v843 = vrot.slane %v707, 7
      %v844 = vsel %vm820, %v842, %v843
      %v845 = vrot.slane %v708, 7
      %v846 = vrot.slane %v709, 7
      %v847 = vsel %vm820, %v845, %v846
      %v848 = vrot.slane %v798, 7
      %v849 = vrot.slane %v799, 7
      %v850 = vsel %vm820, %v848, %v849
      %v871 = vsel %vm820, 0.0, %v821
      %v872 = vsel %vm820, 0.0, %v824
      %v873 = vsel %vm820, 0.0, %v827
      %v874 = vsel %vm820, 0.0, %v830
      %v875 = vsel %vm820, 0.0, %v833
      %v876 = vsel %vm820, 0.0, %v836
      %v877 = vsel %vm820, 0.0, %v839
      %v878 = vsel %vm820, 0.0, %v842
      %v879 = vsel %vm820, 0.0, %v845
      %v880 = vsel %vm820, 0.0, %v848
      %vm881 = vcmask 1046528
      %v882 = vrot.slane %v792, 1
      %v883 = vrot.slane %v793, 1
      %v884 = vsel %vm881, %v882, %v883
      %v885 = vrot.slane %v694, 1
      %v886 = vrot.slane %v695, 1
      %v887 = vsel %vm881, %v885, %v886
      %v888 = vrot.slane %v696, 1
      %v889 = vrot.slane %v697, 1
      %v890 = vsel %vm881, %v888, %v889
      %v891 = vrot.slane %v698, 1
      %v892 = vrot.slane %v699, 1
      %v893 = vsel %vm881, %v891, %v892
      %v894 = vrot.slane %v700, 1
      %v895 = vrot.slane %v701, 1
      %v896 = vsel %vm881, %v894, %v895
      %v897 = vrot.slane %v702, 1
      %v898 = vrot.slane %v703, 1
      %v899 = vsel %vm881, %v897, %v898
      %v900 = vrot.slane %v704, 1
      %v901 = vrot.slane %v705, 1
      %v902 = vsel %vm881, %v900, %v901
      %v903 = vrot.slane %v706, 1
      %v904 = vrot.slane %v707, 1
      %v905 = vsel %vm881, %v903, %v904
      %v906 = vrot.slane %v708, 1
      %v907 = vrot.slane %v709, 1
      %v908 = vsel %vm881, %v906, %v907
      %v909 = vrot.slane %v798, 1
      %v910 = vrot.slane %v799, 1
      %v911 = vsel %vm881, %v909, %v910
      %v932 = vsel %vm881, %v883, 0.0
      %v933 = vsel %vm881, %v886, 0.0
      %v934 = vsel %vm881, %v889, 0.0
      %v935 = vsel %vm881, %v892, 0.0
      %v936 = vsel %vm881, %v895, 0.0
      %v937 = vsel %vm881, %v898, 0.0
      %v938 = vsel %vm881, %v901, 0.0
      %v939 = vsel %vm881, %v904, 0.0
      %v940 = vsel %vm881, %v907, 0.0
      %v941 = vsel %vm881, %v910, 0.0
      %v942 = vld [vmem:[%s6] sm:$0xff]
      %v943 = vld [vmem:[%s6 + $0x8] sm:$0xff]
      %v944 = vld [vmem:[%s6 + $0x10] sm:$0xff]
      %v945 = vld [vmem:[%s6 + $0x18] sm:$0xff]
      %v946 = vld [vmem:[%s6 + $0x20] sm:$0xff]
      %v947 = vld [vmem:[%s6 + $0x28] sm:$0xff]
      %v948 = vld [vmem:[%s6 + $0x30] sm:$0xff]
      %v949 = vld [vmem:[%s6 + $0x38] sm:$0xff]
      %v950 = vld [vmem:[%s6 + $0x40] sm:$0xff]
      %v951 = vld [vmem:[%s6 + $0x48] sm:$0xff]
      %v952 = vld [vmem:[%s6 + $0x50] sm:$0xff]
      %v953 = vld [vmem:[%s6 + $0x58] sm:$0xff]
      %v954 = vld [vmem:[%s6 + $0x60] sm:$0xff]
      %v955 = vld [vmem:[%s6 + $0x68] sm:$0xff]
      %v956 = vld [vmem:[%s6 + $0x70] sm:$0xff]
      %v957 = vld [vmem:[%s6 + $0x78] sm:$0xff]
      %v958 = vld [vmem:[%s6 + $0x80] sm:$0xff]
      %v959 = vld [vmem:[%s6 + $0x88] sm:$0xff]
      %v960 = vld [vmem:[%s6 + $0x90] sm:$0xff]
      %v961 = vld [vmem:[%s6 + $0x98] sm:$0xff]
      %v962 = vld [vmem:[%s6 + $0xa0] sm:$0xff]
      %v963 = vld [vmem:[%s6 + $0xa8] sm:$0xff]
      %v964 = vld [vmem:[%s6 + $0xb0] sm:$0xff]
      %v965 = vld [vmem:[%s6 + $0xb8] sm:$0xff]
      %v966 = vld [vmem:[%s6 + $0xc0] sm:$0xff]
      %v967 = vld [vmem:[%s6 + $0xc8] sm:$0xff]
      %v968 = vld [vmem:[%s6 + $0xd0] sm:$0xff]
      %v969 = vld [vmem:[%s6 + $0xd8] sm:$0xff]
      %v970 = vld [vmem:[%s6 + $0xe0] sm:$0xff]
      %v971 = vld [vmem:[%s6 + $0xe8] sm:$0xff]
      %v972 = vld [vmem:[%s6 + $0xf0] sm:$0xff]
      %v973 = vld [vmem:[%s6 + $0xf8] sm:$0xff]
      %v974 = vld [vmem:[%s6 + $0x100] sm:$0xff]
      %v975 = vld [vmem:[%s6 + $0x108] sm:$0xff]
      %v976 = vld [vmem:[%s6 + $0x110] sm:$0xff]
      %v977 = vld [vmem:[%s6 + $0x118] sm:$0xff]
      %v978 = vld [vmem:[%s6 + $0x120] sm:$0xff]
      %v979 = vld [vmem:[%s6 + $0x128] sm:$0xff]
      %v980 = vld [vmem:[%s6 + $0x130] sm:$0xff]
      %v981 = vld [vmem:[%s6 + $0x138] sm:$0xff]
      %v982 = vld [vmem:[%s6 + $0x140] sm:$0xff]
      %v983 = vld [vmem:[%s6 + $0x148] sm:$0xff]
      %v984 = vld [vmem:[%s6 + $0x150] sm:$0xff]
      %v985 = vld [vmem:[%s6 + $0x158] sm:$0xff]
      %v986 = vld [vmem:[%s6 + $0x160] sm:$0xff]
      %v987 = vld [vmem:[%s6 + $0x168] sm:$0xff]
      %v988 = vld [vmem:[%s6 + $0x170] sm:$0xff]
      %v989 = vld [vmem:[%s6 + $0x178] sm:$0xff]
      %s990 = scalar_lea.vmem %s6, 384
      %v991 = vld [vmem:[%s990] sm:$0xff]
      %v992 = vld [vmem:[%s990 + $0x8] sm:$0xff]
      %v993 = vld [vmem:[%s990 + $0x10] sm:$0xff]
      %v994 = vld [vmem:[%s990 + $0x18] sm:$0xff]
      %v995 = vld [vmem:[%s990 + $0x20] sm:$0xff]
      %v996 = vld [vmem:[%s990 + $0x28] sm:$0xff]
      %v997 = vld [vmem:[%s990 + $0x30] sm:$0xff]
      %v998 = vld [vmem:[%s990 + $0x38] sm:$0xff]
      %v999 = vld [vmem:[%s990 + $0x40] sm:$0xff]
      %v1000 = vld [vmem:[%s990 + $0x48] sm:$0xff]
      %v1001 = vld [vmem:[%s990 + $0x50] sm:$0xff]
      %v1002 = vld [vmem:[%s990 + $0x58] sm:$0xff]
      %v1003 = vld [vmem:[%s990 + $0x60] sm:$0xff]
      %v1004 = vld [vmem:[%s990 + $0x68] sm:$0xff]
      %v1005 = vld [vmem:[%s990 + $0x70] sm:$0xff]
      %v1006 = vld [vmem:[%s990 + $0x78] sm:$0xff]
      %v1007 = vld [vmem:[%s990 + $0x80] sm:$0xff]
      %v1008 = vld [vmem:[%s990 + $0x88] sm:$0xff]
      %v1009 = vld [vmem:[%s990 + $0x90] sm:$0xff]
      %v1010 = vld [vmem:[%s990 + $0x98] sm:$0xff]
      %v1011 = vld [vmem:[%s990 + $0xa0] sm:$0xff]
      %v1012 = vld [vmem:[%s990 + $0xa8] sm:$0xff]
      %v1013 = vld [vmem:[%s990 + $0xb0] sm:$0xff]
      %v1014 = vld [vmem:[%s990 + $0xb8] sm:$0xff]
      %v1015 = vld [vmem:[%s990 + $0xc0] sm:$0xff]
      %v1016 = vld [vmem:[%s990 + $0xc8] sm:$0xff]
      %v1017 = vld [vmem:[%s990 + $0xd0] sm:$0xff]
      %v1018 = vld [vmem:[%s990 + $0xd8] sm:$0xff]
      %v1019 = vld [vmem:[%s990 + $0xe0] sm:$0xff]
      %v1020 = vld [vmem:[%s990 + $0xe8] sm:$0xff]
      %v1021 = vld [vmem:[%s990 + $0xf0] sm:$0xff]
      %v1022 = vld [vmem:[%s990 + $0xf8] sm:$0xff]
      %v1023 = vld [vmem:[%s990 + $0x100] sm:$0xff]
      %v1024 = vld [vmem:[%s990 + $0x108] sm:$0xff]
      %v1025 = vld [vmem:[%s990 + $0x110] sm:$0xff]
      %v1026 = vld [vmem:[%s990 + $0x118] sm:$0xff]
      %v1027 = vld [vmem:[%s990 + $0x120] sm:$0xff]
      %v1028 = vld [vmem:[%s990 + $0x128] sm:$0xff]
      %v1029 = vld [vmem:[%s990 + $0x130] sm:$0xff]
      %v1030 = vld [vmem:[%s990 + $0x138] sm:$0xff]
      %v1031 = vld [vmem:[%s990 + $0x140] sm:$0xff]
      %v1032 = vld [vmem:[%s990 + $0x148] sm:$0xff]
      %v1033 = vld [vmem:[%s990 + $0x150] sm:$0xff]
      %v1034 = vld [vmem:[%s990 + $0x158] sm:$0xff]
      %v1035 = vld [vmem:[%s990 + $0x160] sm:$0xff]
      %v1036 = vld [vmem:[%s990 + $0x168] sm:$0xff]
      %v1037 = vld [vmem:[%s990 + $0x170] sm:$0xff]
      %v1038 = vld [vmem:[%s990 + $0x178] sm:$0xff]
      %1039 = vmatpush.msra.mxu0 %v1006
      %1040 = vmatpush.msra.mxu0 %v1005
      %1041 = vmatpush.msra.mxu0 %v1004
      %1042 = vmatpush.msra.mxu0 %v1003
      %1043 = vmatpush.msra.mxu0 %v1002
      %1044 = vmatpush.msra.mxu0 %v1001
      %1045 = vmatpush.msra.mxu0 %v1000
      %1046 = vmatpush.msra.mxu0 %v999
      %1047 = vmatpush.msra.mxu0 %v998
      %1048 = vmatpush.msra.mxu0 %v997
      %1049 = vmatpush.msra.mxu0 %v996
      %1050 = vmatpush.msra.mxu0 %v995
      %1051 = vmatpush.msra.mxu0 %v994
      %1052 = vmatpush.msra.mxu0 %v993
      %1053 = vmatpush.msra.mxu0 %v992
      %1054 = vmatpush.msra.mxu0 %v991
      %1055 = vmatmul.f32.gmra.mxu0 %v872
      %v1056 = vpop.f32.mrf.mxu0
      %v1057 = vadd.f32 0.0, %v1056
      %1058 = vmatmul.f32.gmra.mxu0 %v826
      %v1059 = vpop.f32.mrf.mxu0
      %v1060 = vadd.f32 0.0, %v1059
      %1061 = vmatmul.f32.gmra.mxu0 %v873
      %v1062 = vpop.f32.mrf.mxu0
      %v1063 = vadd.f32 0.0, %v1062
      %1064 = vmatmul.f32.gmra.mxu0 %v829
      %v1065 = vpop.f32.mrf.mxu0
      %v1066 = vadd.f32 0.0, %v1065
      %1067 = vmatmul.f32.gmra.mxu0 %v874
      %v1068 = vpop.f32.mrf.mxu0
      %v1069 = vadd.f32 0.0, %v1068
      %1070 = vmatmul.f32.gmra.mxu0 %v832
      %v1071 = vpop.f32.mrf.mxu0
      %v1072 = vadd.f32 0.0, %v1071
      %1073 = vmatmul.f32.gmra.mxu0 %v875
      %v1074 = vpop.f32.mrf.mxu0
      %v1075 = vadd.f32 0.0, %v1074
      %1076 = vmatmul.f32.gmra.mxu0 %v835
      %v1077 = vpop.f32.mrf.mxu0
      %v1078 = vadd.f32 0.0, %v1077
      %1079 = vmatmul.f32.gmra.mxu0 %v876
      %v1080 = vpop.f32.mrf.mxu0
      %v1081 = vadd.f32 0.0, %v1080
      %1082 = vmatmul.f32.gmra.mxu0 %v838
      %v1083 = vpop.f32.mrf.mxu0
      %v1084 = vadd.f32 0.0, %v1083
      %1085 = vmatmul.f32.gmra.mxu0 %v877
      %v1086 = vpop.f32.mrf.mxu0
      %v1087 = vadd.f32 0.0, %v1086
      %1088 = vmatmul.f32.gmra.mxu0 %v841
      %v1089 = vpop.f32.mrf.mxu0
      %v1090 = vadd.f32 0.0, %v1089
      %1091 = vmatmul.f32.gmra.mxu0 %v878
      %v1092 = vpop.f32.mrf.mxu0
      %v1093 = vadd.f32 0.0, %v1092
      %1094 = vmatmul.f32.gmra.mxu0 %v844
      %v1095 = vpop.f32.mrf.mxu0
      %v1096 = vadd.f32 0.0, %v1095
      %1097 = vmatmul.f32.gmra.mxu0 %v879
      %v1098 = vpop.f32.mrf.mxu0
      %v1099 = vadd.f32 0.0, %v1098
      %1100 = vmatmul.f32.gmra.mxu0 %v847
      %v1101 = vpop.f32.mrf.mxu0
      %v1102 = vadd.f32 0.0, %v1101
      %1103 = vdwg.mxu0
      %1104 = vmatpush.msra.mxu0 %v1022
      %1105 = vmatpush.msra.mxu0 %v1021
      %1106 = vmatpush.msra.mxu0 %v1020
      %1107 = vmatpush.msra.mxu0 %v1019
      %1108 = vmatpush.msra.mxu0 %v1018
      %1109 = vmatpush.msra.mxu0 %v1017
      %1110 = vmatpush.msra.mxu0 %v1016
      %1111 = vmatpush.msra.mxu0 %v1015
      %1112 = vmatpush.msra.mxu0 %v1014
      %1113 = vmatpush.msra.mxu0 %v1013
      %1114 = vmatpush.msra.mxu0 %v1012
      %1115 = vmatpush.msra.mxu0 %v1011
      %1116 = vmatpush.msra.mxu0 %v1010
      %1117 = vmatpush.msra.mxu0 %v1009
      %1118 = vmatpush.msra.mxu0 %v1008
      %1119 = vmatpush.msra.mxu0 %v1007
      %1120 = vmatmul.f32.gmra.mxu0 %v694
      %v1121 = vpop.f32.mrf.mxu0
      %v1122 = vadd.f32 %v1057, %v1121
      %1123 = vmatmul.f32.gmra.mxu0 %v695
      %v1124 = vpop.f32.mrf.mxu0
      %v1125 = vadd.f32 %v1060, %v1124
      %1126 = vmatmul.f32.gmra.mxu0 %v696
      %v1127 = vpop.f32.mrf.mxu0
      %v1128 = vadd.f32 %v1063, %v1127
      %1129 = vmatmul.f32.gmra.mxu0 %v697
      %v1130 = vpop.f32.mrf.mxu0
      %v1131 = vadd.f32 %v1066, %v1130
      %1132 = vmatmul.f32.gmra.mxu0 %v698
      %v1133 = vpop.f32.mrf.mxu0
      %v1134 = vadd.f32 %v1069, %v1133
      %1135 = vmatmul.f32.gmra.mxu0 %v699
      %v1136 = vpop.f32.mrf.mxu0
      %v1137 = vadd.f32 %v1072, %v1136
      %1138 = vmatmul.f32.gmra.mxu0 %v700
      %v1139 = vpop.f32.mrf.mxu0
      %v1140 = vadd.f32 %v1075, %v1139
      %1141 = vmatmul.f32.gmra.mxu0 %v701
      %v1142 = vpop.f32.mrf.mxu0
      %v1143 = vadd.f32 %v1078, %v1142
      %1144 = vmatmul.f32.gmra.mxu0 %v702
      %v1145 = vpop.f32.mrf.mxu0
      %v1146 = vadd.f32 %v1081, %v1145
      %1147 = vmatmul.f32.gmra.mxu0 %v703
      %v1148 = vpop.f32.mrf.mxu0
      %v1149 = vadd.f32 %v1084, %v1148
      %1150 = vmatmul.f32.gmra.mxu0 %v704
      %v1151 = vpop.f32.mrf.mxu0
      %v1152 = vadd.f32 %v1087, %v1151
      %1153 = vmatmul.f32.gmra.mxu0 %v705
      %v1154 = vpop.f32.mrf.mxu0
      %v1155 = vadd.f32 %v1090, %v1154
      %1156 = vmatmul.f32.gmra.mxu0 %v706
      %v1157 = vpop.f32.mrf.mxu0
      %v1158 = vadd.f32 %v1093, %v1157
      %1159 = vmatmul.f32.gmra.mxu0 %v707
      %v1160 = vpop.f32.mrf.mxu0
      %v1161 = vadd.f32 %v1096, %v1160
      %1162 = vmatmul.f32.gmra.mxu0 %v708
      %v1163 = vpop.f32.mrf.mxu0
      %v1164 = vadd.f32 %v1099, %v1163
      %1165 = vmatmul.f32.gmra.mxu0 %v709
      %v1166 = vpop.f32.mrf.mxu0
      %v1167 = vadd.f32 %v1102, %v1166
      %1168 = vdwg.mxu0
      %1169 = vmatpush.msra.mxu0 %v1038
      %1170 = vmatpush.msra.mxu0 %v1037
      %1171 = vmatpush.msra.mxu0 %v1036
      %1172 = vmatpush.msra.mxu0 %v1035
      %1173 = vmatpush.msra.mxu0 %v1034
      %1174 = vmatpush.msra.mxu0 %v1033
      %1175 = vmatpush.msra.mxu0 %v1032
      %1176 = vmatpush.msra.mxu0 %v1031
      %1177 = vmatpush.msra.mxu0 %v1030
      %1178 = vmatpush.msra.mxu0 %v1029
      %1179 = vmatpush.msra.mxu0 %v1028
      %1180 = vmatpush.msra.mxu0 %v1027
      %1181 = vmatpush.msra.mxu0 %v1026
      %1182 = vmatpush.msra.mxu0 %v1025
      %1183 = vmatpush.msra.mxu0 %v1024
      %1184 = vmatpush.msra.mxu0 %v1023
      %1185 = vmatmul.f32.gmra.mxu0 %v887
      %v1186 = vpop.f32.mrf.mxu0
      %v1187 = vadd.f32 %v1122, %v1186
      %1188 = vmatmul.f32.gmra.mxu0 %v933
      %v1189 = vpop.f32.mrf.mxu0
      %v1190 = vadd.f32 %v1125, %v1189
      %1191 = vmatmul.f32.gmra.mxu0 %v890
      %v1192 = vpop.f32.mrf.mxu0
      %v1193 = vadd.f32 %v1128, %v1192
      %1194 = vmatmul.f32.gmra.mxu0 %v934
      %v1195 = vpop.f32.mrf.mxu0
      %v1196 = vadd.f32 %v1131, %v1195
      %1197 = vmatmul.f32.gmra.mxu0 %v893
      %v1198 = vpop.f32.mrf.mxu0
      %v1199 = vadd.f32 %v1134, %v1198
      %1200 = vmatmul.f32.gmra.mxu0 %v935
      %v1201 = vpop.f32.mrf.mxu0
      %v1202 = vadd.f32 %v1137, %v1201
      %1203 = vmatmul.f32.gmra.mxu0 %v896
      %v1204 = vpop.f32.mrf.mxu0
      %v1205 = vadd.f32 %v1140, %v1204
      %1206 = vmatmul.f32.gmra.mxu0 %v936
      %v1207 = vpop.f32.mrf.mxu0
      %v1208 = vadd.f32 %v1143, %v1207
      %1209 = vmatmul.f32.gmra.mxu0 %v899
      %v1210 = vpop.f32.mrf.mxu0
      %v1211 = vadd.f32 %v1146, %v1210
      %1212 = vmatmul.f32.gmra.mxu0 %v937
      %v1213 = vpop.f32.mrf.mxu0
      %v1214 = vadd.f32 %v1149, %v1213
      %1215 = vmatmul.f32.gmra.mxu0 %v902
      %v1216 = vpop.f32.mrf.mxu0
      %v1217 = vadd.f32 %v1152, %v1216
      %1218 = vmatmul.f32.gmra.mxu0 %v938
      %v1219 = vpop.f32.mrf.mxu0
      %v1220 = vadd.f32 %v1155, %v1219
      %1221 = vmatmul.f32.gmra.mxu0 %v905
      %v1222 = vpop.f32.mrf.mxu0
      %v1223 = vadd.f32 %v1158, %v1222
      %1224 = vmatmul.f32.gmra.mxu0 %v939
      %v1225 = vpop.f32.mrf.mxu0
      %v1226 = vadd.f32 %v1161, %v1225
      %1227 = vmatmul.f32.gmra.mxu0 %v908
      %v1228 = vpop.f32.mrf.mxu0
      %v1229 = vadd.f32 %v1164, %v1228
      %1230 = vmatmul.f32.gmra.mxu0 %v940
      %v1231 = vpop.f32.mrf.mxu0
      %v1232 = vadd.f32 %v1167, %v1231
      %1233 = vdwg.mxu0
      %1234 = vmatpush.msra.mxu0 %v957
      %1235 = vmatpush.msra.mxu0 %v956
      %1236 = vmatpush.msra.mxu0 %v955
      %1237 = vmatpush.msra.mxu0 %v954
      %1238 = vmatpush.msra.mxu0 %v953
      %1239 = vmatpush.msra.mxu0 %v952
      %1240 = vmatpush.msra.mxu0 %v951
      %1241 = vmatpush.msra.mxu0 %v950
      %1242 = vmatpush.msra.mxu0 %v949
      %1243 = vmatpush.msra.mxu0 %v948
      %1244 = vmatpush.msra.mxu0 %v947
      %1245 = vmatpush.msra.mxu0 %v946
      %1246 = vmatpush.msra.mxu0 %v945
      %1247 = vmatpush.msra.mxu0 %v944
      %1248 = vmatpush.msra.mxu0 %v943
      %1249 = vmatpush.msra.mxu0 %v942
      %1250 = vmatmul.f32.gmra.mxu0 %v871
      %v1251 = vpop.f32.mrf.mxu0
      %v1252 = vadd.f32 %v1187, %v1251
      %1253 = vmatmul.f32.gmra.mxu0 %v823
      %v1254 = vpop.f32.mrf.mxu0
      %v1255 = vadd.f32 %v1190, %v1254
      %1256 = vmatmul.f32.gmra.mxu0 %v872
      %v1257 = vpop.f32.mrf.mxu0
      %v1258 = vadd.f32 %v1193, %v1257
      %1259 = vmatmul.f32.gmra.mxu0 %v826
      %v1260 = vpop.f32.mrf.mxu0
      %v1261 = vadd.f32 %v1196, %v1260
      %1262 = vmatmul.f32.gmra.mxu0 %v873
      %v1263 = vpop.f32.mrf.mxu0
      %v1264 = vadd.f32 %v1199, %v1263
      %1265 = vmatmul.f32.gmra.mxu0 %v829
      %v1266 = vpop.f32.mrf.mxu0
      %v1267 = vadd.f32 %v1202, %v1266
      %1268 = vmatmul.f32.gmra.mxu0 %v874
      %v1269 = vpop.f32.mrf.mxu0
      %v1270 = vadd.f32 %v1205, %v1269
      %1271 = vmatmul.f32.gmra.mxu0 %v832
      %v1272 = vpop.f32.mrf.mxu0
      %v1273 = vadd.f32 %v1208, %v1272
      %1274 = vmatmul.f32.gmra.mxu0 %v875
      %v1275 = vpop.f32.mrf.mxu0
      %v1276 = vadd.f32 %v1211, %v1275
      %1277 = vmatmul.f32.gmra.mxu0 %v835
      %v1278 = vpop.f32.mrf.mxu0
      %v1279 = vadd.f32 %v1214, %v1278
      %1280 = vmatmul.f32.gmra.mxu0 %v876
      %v1281 = vpop.f32.mrf.mxu0
      %v1282 = vadd.f32 %v1217, %v1281
      %1283 = vmatmul.f32.gmra.mxu0 %v838
      %v1284 = vpop.f32.mrf.mxu0
      %v1285 = vadd.f32 %v1220, %v1284
      %1286 = vmatmul.f32.gmra.mxu0 %v877
      %v1287 = vpop.f32.mrf.mxu0
      %v1288 = vadd.f32 %v1223, %v1287
      %1289 = vmatmul.f32.gmra.mxu0 %v841
      %v1290 = vpop.f32.mrf.mxu0
      %v1291 = vadd.f32 %v1226, %v1290
      %1292 = vmatmul.f32.gmra.mxu0 %v878
      %v1293 = vpop.f32.mrf.mxu0
      %v1294 = vadd.f32 %v1229, %v1293
      %1295 = vmatmul.f32.gmra.mxu0 %v844
      %v1296 = vpop.f32.mrf.mxu0
      %v1297 = vadd.f32 %v1232, %v1296
      %1298 = vdwg.mxu0
      %1299 = vmatpush.msra.mxu0 %v973
      %1300 = vmatpush.msra.mxu0 %v972
      %1301 = vmatpush.msra.mxu0 %v971
      %1302 = vmatpush.msra.mxu0 %v970
      %1303 = vmatpush.msra.mxu0 %v969
      %1304 = vmatpush.msra.mxu0 %v968
      %1305 = vmatpush.msra.mxu0 %v967
      %1306 = vmatpush.msra.mxu0 %v966
      %1307 = vmatpush.msra.mxu0 %v965
      %1308 = vmatpush.msra.mxu0 %v964
      %1309 = vmatpush.msra.mxu0 %v963
      %1310 = vmatpush.msra.mxu0 %v962
      %1311 = vmatpush.msra.mxu0 %v961
      %1312 = vmatpush.msra.mxu0 %v960
      %1313 = vmatpush.msra.mxu0 %v959
      %1314 = vmatpush.msra.mxu0 %v958
      %1315 = vmatmul.f32.gmra.mxu0 %v792
      %v1316 = vpop.f32.mrf.mxu0
      %v1317 = vadd.f32 %v1252, %v1316
      %1318 = vmatmul.f32.gmra.mxu0 %v793
      %v1319 = vpop.f32.mrf.mxu0
      %v1320 = vadd.f32 %v1255, %v1319
      %1321 = vmatmul.f32.gmra.mxu0 %v694
      %v1322 = vpop.f32.mrf.mxu0
      %v1323 = vadd.f32 %v1258, %v1322
      %1324 = vmatmul.f32.gmra.mxu0 %v695
      %v1325 = vpop.f32.mrf.mxu0
      %v1326 = vadd.f32 %v1261, %v1325
      %1327 = vmatmul.f32.gmra.mxu0 %v696
      %v1328 = vpop.f32.mrf.mxu0
      %v1329 = vadd.f32 %v1264, %v1328
      %1330 = vmatmul.f32.gmra.mxu0 %v697
      %v1331 = vpop.f32.mrf.mxu0
      %v1332 = vadd.f32 %v1267, %v1331
      %1333 = vmatmul.f32.gmra.mxu0 %v698
      %v1334 = vpop.f32.mrf.mxu0
      %v1335 = vadd.f32 %v1270, %v1334
      %1336 = vmatmul.f32.gmra.mxu0 %v699
      %v1337 = vpop.f32.mrf.mxu0
      %v1338 = vadd.f32 %v1273, %v1337
      %1339 = vmatmul.f32.gmra.mxu0 %v700
      %v1340 = vpop.f32.mrf.mxu0
      %v1341 = vadd.f32 %v1276, %v1340
      %1342 = vmatmul.f32.gmra.mxu0 %v701
      %v1343 = vpop.f32.mrf.mxu0
      %v1344 = vadd.f32 %v1279, %v1343
      %1345 = vmatmul.f32.gmra.mxu0 %v702
      %v1346 = vpop.f32.mrf.mxu0
      %v1347 = vadd.f32 %v1282, %v1346
      %1348 = vmatmul.f32.gmra.mxu0 %v703
      %v1349 = vpop.f32.mrf.mxu0
      %v1350 = vadd.f32 %v1285, %v1349
      %1351 = vmatmul.f32.gmra.mxu0 %v704
      %v1352 = vpop.f32.mrf.mxu0
      %v1353 = vadd.f32 %v1288, %v1352
      %1354 = vmatmul.f32.gmra.mxu0 %v705
      %v1355 = vpop.f32.mrf.mxu0
      %v1356 = vadd.f32 %v1291, %v1355
      %1357 = vmatmul.f32.gmra.mxu0 %v706
      %v1358 = vpop.f32.mrf.mxu0
      %v1359 = vadd.f32 %v1294, %v1358
      %1360 = vmatmul.f32.gmra.mxu0 %v707
      %v1361 = vpop.f32.mrf.mxu0
      %v1362 = vadd.f32 %v1297, %v1361
      %1363 = vdwg.mxu0
      %1364 = vmatpush.msra.mxu0 %v989
      %1365 = vmatpush.msra.mxu0 %v988
      %1366 = vmatpush.msra.mxu0 %v987
      %1367 = vmatpush.msra.mxu0 %v986
      %1368 = vmatpush.msra.mxu0 %v985
      %1369 = vmatpush.msra.mxu0 %v984
      %1370 = vmatpush.msra.mxu0 %v983
      %1371 = vmatpush.msra.mxu0 %v982
      %1372 = vmatpush.msra.mxu0 %v981
      %1373 = vmatpush.msra.mxu0 %v980
      %1374 = vmatpush.msra.mxu0 %v979
      %1375 = vmatpush.msra.mxu0 %v978
      %1376 = vmatpush.msra.mxu0 %v977
      %1377 = vmatpush.msra.mxu0 %v976
      %1378 = vmatpush.msra.mxu0 %v975
      %1379 = vmatpush.msra.mxu0 %v974
      %1380 = vmatmul.f32.gmra.mxu0 %v884
      %v1381 = vpop.f32.mrf.mxu0
      %v1382 = vadd.f32 %v1317, %v1381
      %1383 = vmatmul.f32.gmra.mxu0 %v932
      %v1384 = vpop.f32.mrf.mxu0
      %v1385 = vadd.f32 %v1320, %v1384
      %1386 = vmatmul.f32.gmra.mxu0 %v887
      %v1387 = vpop.f32.mrf.mxu0
      %v1388 = vadd.f32 %v1323, %v1387
      %1389 = vmatmul.f32.gmra.mxu0 %v933
      %v1390 = vpop.f32.mrf.mxu0
      %v1391 = vadd.f32 %v1326, %v1390
      %1392 = vmatmul.f32.gmra.mxu0 %v890
      %v1393 = vpop.f32.mrf.mxu0
      %v1394 = vadd.f32 %v1329, %v1393
      %1395 = vmatmul.f32.gmra.mxu0 %v934
      %v1396 = vpop.f32.mrf.mxu0
      %v1397 = vadd.f32 %v1332, %v1396
      %1398 = vmatmul.f32.gmra.mxu0 %v893
      %v1399 = vpop.f32.mrf.mxu0
      %v1400 = vadd.f32 %v1335, %v1399
      %1401 = vmatmul.f32.gmra.mxu0 %v935
      %v1402 = vpop.f32.mrf.mxu0
      %v1403 = vadd.f32 %v1338, %v1402
      %1404 = vmatmul.f32.gmra.mxu0 %v896
      %v1405 = vpop.f32.mrf.mxu0
      %v1406 = vadd.f32 %v1341, %v1405
      %1407 = vmatmul.f32.gmra.mxu0 %v936
      %v1408 = vpop.f32.mrf.mxu0
      %v1409 = vadd.f32 %v1344, %v1408
      %1410 = vmatmul.f32.gmra.mxu0 %v899
      %v1411 = vpop.f32.mrf.mxu0
      %v1412 = vadd.f32 %v1347, %v1411
      %1413 = vmatmul.f32.gmra.mxu0 %v937
      %v1414 = vpop.f32.mrf.mxu0
      %v1415 = vadd.f32 %v1350, %v1414
      %1416 = vmatmul.f32.gmra.mxu0 %v902
      %v1417 = vpop.f32.mrf.mxu0
      %v1418 = vadd.f32 %v1353, %v1417
      %1419 = vmatmul.f32.gmra.mxu0 %v938
      %v1420 = vpop.f32.mrf.mxu0
      %v1421 = vadd.f32 %v1356, %v1420
      %1422 = vmatmul.f32.gmra.mxu0 %v905
      %v1423 = vpop.f32.mrf.mxu0
      %v1424 = vadd.f32 %v1359, %v1423
      %1425 = vmatmul.f32.gmra.mxu0 %v939
      %v1426 = vpop.f32.mrf.mxu0
      %v1427 = vadd.f32 %v1362, %v1426
      %1428 = vdwg.mxu0
      %s1429 = scalar_lea.vmem %s6, 768
      %v1430 = vld [vmem:[%s1429] sm:$0xff]
      %v1431 = vld [vmem:[%s1429 + $0x8] sm:$0xff]
      %v1432 = vld [vmem:[%s1429 + $0x10] sm:$0xff]
      %v1433 = vld [vmem:[%s1429 + $0x18] sm:$0xff]
      %v1434 = vld [vmem:[%s1429 + $0x20] sm:$0xff]
      %v1435 = vld [vmem:[%s1429 + $0x28] sm:$0xff]
      %v1436 = vld [vmem:[%s1429 + $0x30] sm:$0xff]
      %v1437 = vld [vmem:[%s1429 + $0x38] sm:$0xff]
      %v1438 = vld [vmem:[%s1429 + $0x40] sm:$0xff]
      %v1439 = vld [vmem:[%s1429 + $0x48] sm:$0xff]
      %v1440 = vld [vmem:[%s1429 + $0x50] sm:$0xff]
      %v1441 = vld [vmem:[%s1429 + $0x58] sm:$0xff]
      %v1442 = vld [vmem:[%s1429 + $0x60] sm:$0xff]
      %v1443 = vld [vmem:[%s1429 + $0x68] sm:$0xff]
      %v1444 = vld [vmem:[%s1429 + $0x70] sm:$0xff]
      %v1445 = vld [vmem:[%s1429 + $0x78] sm:$0xff]
      %v1446 = vld [vmem:[%s1429 + $0x80] sm:$0xff]
      %v1447 = vld [vmem:[%s1429 + $0x88] sm:$0xff]
      %v1448 = vld [vmem:[%s1429 + $0x90] sm:$0xff]
      %v1449 = vld [vmem:[%s1429 + $0x98] sm:$0xff]
      %v1450 = vld [vmem:[%s1429 + $0xa0] sm:$0xff]
      %v1451 = vld [vmem:[%s1429 + $0xa8] sm:$0xff]
      %v1452 = vld [vmem:[%s1429 + $0xb0] sm:$0xff]
      %v1453 = vld [vmem:[%s1429 + $0xb8] sm:$0xff]
      %v1454 = vld [vmem:[%s1429 + $0xc0] sm:$0xff]
      %v1455 = vld [vmem:[%s1429 + $0xc8] sm:$0xff]
      %v1456 = vld [vmem:[%s1429 + $0xd0] sm:$0xff]
      %v1457 = vld [vmem:[%s1429 + $0xd8] sm:$0xff]
      %v1458 = vld [vmem:[%s1429 + $0xe0] sm:$0xff]
      %v1459 = vld [vmem:[%s1429 + $0xe8] sm:$0xff]
      %v1460 = vld [vmem:[%s1429 + $0xf0] sm:$0xff]
      %v1461 = vld [vmem:[%s1429 + $0xf8] sm:$0xff]
      %v1462 = vld [vmem:[%s1429 + $0x100] sm:$0xff]
      %v1463 = vld [vmem:[%s1429 + $0x108] sm:$0xff]
      %v1464 = vld [vmem:[%s1429 + $0x110] sm:$0xff]
      %v1465 = vld [vmem:[%s1429 + $0x118] sm:$0xff]
      %v1466 = vld [vmem:[%s1429 + $0x120] sm:$0xff]
      %v1467 = vld [vmem:[%s1429 + $0x128] sm:$0xff]
      %v1468 = vld [vmem:[%s1429 + $0x130] sm:$0xff]
      %v1469 = vld [vmem:[%s1429 + $0x138] sm:$0xff]
      %v1470 = vld [vmem:[%s1429 + $0x140] sm:$0xff]
      %v1471 = vld [vmem:[%s1429 + $0x148] sm:$0xff]
      %v1472 = vld [vmem:[%s1429 + $0x150] sm:$0xff]
      %v1473 = vld [vmem:[%s1429 + $0x158] sm:$0xff]
      %v1474 = vld [vmem:[%s1429 + $0x160] sm:$0xff]
      %v1475 = vld [vmem:[%s1429 + $0x168] sm:$0xff]
      %v1476 = vld [vmem:[%s1429 + $0x170] sm:$0xff]
      %v1477 = vld [vmem:[%s1429 + $0x178] sm:$0xff]
      %1478 = vmatpush.msra.mxu0 %v1445
      %1479 = vmatpush.msra.mxu0 %v1444
      %1480 = vmatpush.msra.mxu0 %v1443
      %1481 = vmatpush.msra.mxu0 %v1442
      %1482 = vmatpush.msra.mxu0 %v1441
      %1483 = vmatpush.msra.mxu0 %v1440
      %1484 = vmatpush.msra.mxu0 %v1439
      %1485 = vmatpush.msra.mxu0 %v1438
      %1486 = vmatpush.msra.mxu0 %v1437
      %1487 = vmatpush.msra.mxu0 %v1436
      %1488 = vmatpush.msra.mxu0 %v1435
      %1489 = vmatpush.msra.mxu0 %v1434
      %1490 = vmatpush.msra.mxu0 %v1433
      %1491 = vmatpush.msra.mxu0 %v1432
      %1492 = vmatpush.msra.mxu0 %v1431
      %1493 = vmatpush.msra.mxu0 %v1430
      %1494 = vmatmul.f32.gmra.mxu0 %v873
      %v1495 = vpop.f32.mrf.mxu0
      %v1496 = vadd.f32 0.0, %v1495
      %1497 = vmatmul.f32.gmra.mxu0 %v829
      %v1498 = vpop.f32.mrf.mxu0
      %v1499 = vadd.f32 0.0, %v1498
      %1500 = vmatmul.f32.gmra.mxu0 %v874
      %v1501 = vpop.f32.mrf.mxu0
      %v1502 = vadd.f32 0.0, %v1501
      %1503 = vmatmul.f32.gmra.mxu0 %v832
      %v1504 = vpop.f32.mrf.mxu0
      %v1505 = vadd.f32 0.0, %v1504
      %1506 = vmatmul.f32.gmra.mxu0 %v875
      %v1507 = vpop.f32.mrf.mxu0
      %v1508 = vadd.f32 0.0, %v1507
      %1509 = vmatmul.f32.gmra.mxu0 %v835
      %v1510 = vpop.f32.mrf.mxu0
      %v1511 = vadd.f32 0.0, %v1510
      %1512 = vmatmul.f32.gmra.mxu0 %v876
      %v1513 = vpop.f32.mrf.mxu0
      %v1514 = vadd.f32 0.0, %v1513
      %1515 = vmatmul.f32.gmra.mxu0 %v838
      %v1516 = vpop.f32.mrf.mxu0
      %v1517 = vadd.f32 0.0, %v1516
      %1518 = vmatmul.f32.gmra.mxu0 %v877
      %v1519 = vpop.f32.mrf.mxu0
      %v1520 = vadd.f32 0.0, %v1519
      %1521 = vmatmul.f32.gmra.mxu0 %v841
      %v1522 = vpop.f32.mrf.mxu0
      %v1523 = vadd.f32 0.0, %v1522
      %1524 = vmatmul.f32.gmra.mxu0 %v878
      %v1525 = vpop.f32.mrf.mxu0
      %v1526 = vadd.f32 0.0, %v1525
      %1527 = vmatmul.f32.gmra.mxu0 %v844
      %v1528 = vpop.f32.mrf.mxu0
      %v1529 = vadd.f32 0.0, %v1528
      %1530 = vmatmul.f32.gmra.mxu0 %v879
      %v1531 = vpop.f32.mrf.mxu0
      %v1532 = vadd.f32 0.0, %v1531
      %1533 = vmatmul.f32.gmra.mxu0 %v847
      %v1534 = vpop.f32.mrf.mxu0
      %v1535 = vadd.f32 0.0, %v1534
      %1536 = vmatmul.f32.gmra.mxu0 %v880
      %v1537 = vpop.f32.mrf.mxu0
      %v1538 = vadd.f32 0.0, %v1537
      %1539 = vmatmul.f32.gmra.mxu0 %v850
      %v1540 = vpop.f32.mrf.mxu0
      %v1541 = vadd.f32 0.0, %v1540
      %1542 = vdwg.mxu0
      %1543 = vmatpush.msra.mxu0 %v1461
      %1544 = vmatpush.msra.mxu0 %v1460
      %1545 = vmatpush.msra.mxu0 %v1459
      %1546 = vmatpush.msra.mxu0 %v1458
      %1547 = vmatpush.msra.mxu0 %v1457
      %1548 = vmatpush.msra.mxu0 %v1456
      %1549 = vmatpush.msra.mxu0 %v1455
      %1550 = vmatpush.msra.mxu0 %v1454
      %1551 = vmatpush.msra.mxu0 %v1453
      %1552 = vmatpush.msra.mxu0 %v1452
      %1553 = vmatpush.msra.mxu0 %v1451
      %1554 = vmatpush.msra.mxu0 %v1450
      %1555 = vmatpush.msra.mxu0 %v1449
      %1556 = vmatpush.msra.mxu0 %v1448
      %1557 = vmatpush.msra.mxu0 %v1447
      %1558 = vmatpush.msra.mxu0 %v1446
      %1559 = vmatmul.f32.gmra.mxu0 %v696
      %v1560 = vpop.f32.mrf.mxu0
      %v1561 = vadd.f32 %v1496, %v1560
      %1562 = vmatmul.f32.gmra.mxu0 %v697
      %v1563 = vpop.f32.mrf.mxu0
      %v1564 = vadd.f32 %v1499, %v1563
      %1565 = vmatmul.f32.gmra.mxu0 %v698
      %v1566 = vpop.f32.mrf.mxu0
      %v1567 = vadd.f32 %v1502, %v1566
      %1568 = vmatmul.f32.gmra.mxu0 %v699
      %v1569 = vpop.f32.mrf.mxu0
      %v1570 = vadd.f32 %v1505, %v1569
      %1571 = vmatmul.f32.gmra.mxu0 %v700
      %v1572 = vpop.f32.mrf.mxu0
      %v1573 = vadd.f32 %v1508, %v1572
      %1574 = vmatmul.f32.gmra.mxu0 %v701
      %v1575 = vpop.f32.mrf.mxu0
      %v1576 = vadd.f32 %v1511, %v1575
      %1577 = vmatmul.f32.gmra.mxu0 %v702
      %v1578 = vpop.f32.mrf.mxu0
      %v1579 = vadd.f32 %v1514, %v1578
      %1580 = vmatmul.f32.gmra.mxu0 %v703
      %v1581 = vpop.f32.mrf.mxu0
      %v1582 = vadd.f32 %v1517, %v1581
      %1583 = vmatmul.f32.gmra.mxu0 %v704
      %v1584 = vpop.f32.mrf.mxu0
      %v1585 = vadd.f32 %v1520, %v1584
      %1586 = vmatmul.f32.gmra.mxu0 %v705
      %v1587 = vpop.f32.mrf.mxu0
      %v1588 = vadd.f32 %v1523, %v1587
      %1589 = vmatmul.f32.gmra.mxu0 %v706
      %v1590 = vpop.f32.mrf.mxu0
      %v1591 = vadd.f32 %v1526, %v1590
      %1592 = vmatmul.f32.gmra.mxu0 %v707
      %v1593 = vpop.f32.mrf.mxu0
      %v1594 = vadd.f32 %v1529, %v1593
      %1595 = vmatmul.f32.gmra.mxu0 %v708
      %v1596 = vpop.f32.mrf.mxu0
      %v1597 = vadd.f32 %v1532, %v1596
      %1598 = vmatmul.f32.gmra.mxu0 %v709
      %v1599 = vpop.f32.mrf.mxu0
      %v1600 = vadd.f32 %v1535, %v1599
      %1601 = vmatmul.f32.gmra.mxu0 %v798
      %v1602 = vpop.f32.mrf.mxu0
      %v1603 = vadd.f32 %v1538, %v1602
      %1604 = vmatmul.f32.gmra.mxu0 %v799
      %v1605 = vpop.f32.mrf.mxu0
      %v1606 = vadd.f32 %v1541, %v1605
      %1607 = vdwg.mxu0
      %1608 = vmatpush.msra.mxu0 %v1477
      %1609 = vmatpush.msra.mxu0 %v1476
      %1610 = vmatpush.msra.mxu0 %v1475
      %1611 = vmatpush.msra.mxu0 %v1474
      %1612 = vmatpush.msra.mxu0 %v1473
      %1613 = vmatpush.msra.mxu0 %v1472
      %1614 = vmatpush.msra.mxu0 %v1471
      %1615 = vmatpush.msra.mxu0 %v1470
      %1616 = vmatpush.msra.mxu0 %v1469
      %1617 = vmatpush.msra.mxu0 %v1468
      %1618 = vmatpush.msra.mxu0 %v1467
      %1619 = vmatpush.msra.mxu0 %v1466
      %1620 = vmatpush.msra.mxu0 %v1465
      %1621 = vmatpush.msra.mxu0 %v1464
      %1622 = vmatpush.msra.mxu0 %v1463
      %1623 = vmatpush.msra.mxu0 %v1462
      %1624 = vmatmul.f32.gmra.mxu0 %v890
      %v1625 = vpop.f32.mrf.mxu0
      %v1626 = vadd.f32 %v1561, %v1625
      %1627 = vmatmul.f32.gmra.mxu0 %v934
      %v1628 = vpop.f32.mrf.mxu0
      %v1629 = vadd.f32 %v1564, %v1628
      %1630 = vmatmul.f32.gmra.mxu0 %v893
      %v1631 = vpop.f32.mrf.mxu0
      %v1632 = vadd.f32 %v1567, %v1631
      %1633 = vmatmul.f32.gmra.mxu0 %v935
      %v1634 = vpop.f32.mrf.mxu0
      %v1635 = vadd.f32 %v1570, %v1634
      %1636 = vmatmul.f32.gmra.mxu0 %v896
      %v1637 = vpop.f32.mrf.mxu0
      %v1638 = vadd.f32 %v1573, %v1637
      %1639 = vmatmul.f32.gmra.mxu0 %v936
      %v1640 = vpop.f32.mrf.mxu0
      %v1641 = vadd.f32 %v1576, %v1640
      %1642 = vmatmul.f32.gmra.mxu0 %v899
      %v1643 = vpop.f32.mrf.mxu0
      %v1644 = vadd.f32 %v1579, %v1643
      %1645 = vmatmul.f32.gmra.mxu0 %v937
      %v1646 = vpop.f32.mrf.mxu0
      %v1647 = vadd.f32 %v1582, %v1646
      %1648 = vmatmul.f32.gmra.mxu0 %v902
      %v1649 = vpop.f32.mrf.mxu0
      %v1650 = vadd.f32 %v1585, %v1649
      %1651 = vmatmul.f32.gmra.mxu0 %v938
      %v1652 = vpop.f32.mrf.mxu0
      %v1653 = vadd.f32 %v1588, %v1652
      %1654 = vmatmul.f32.gmra.mxu0 %v905
      %v1655 = vpop.f32.mrf.mxu0
      %v1656 = vadd.f32 %v1591, %v1655
      %1657 = vmatmul.f32.gmra.mxu0 %v939
      %v1658 = vpop.f32.mrf.mxu0
      %v1659 = vadd.f32 %v1594, %v1658
      %1660 = vmatmul.f32.gmra.mxu0 %v908
      %v1661 = vpop.f32.mrf.mxu0
      %v1662 = vadd.f32 %v1597, %v1661
      %1663 = vmatmul.f32.gmra.mxu0 %v940
      %v1664 = vpop.f32.mrf.mxu0
      %v1665 = vadd.f32 %v1600, %v1664
      %1666 = vmatmul.f32.gmra.mxu0 %v911
      %v1667 = vpop.f32.mrf.mxu0
      %v1668 = vadd.f32 %v1603, %v1667
      %1669 = vmatmul.f32.gmra.mxu0 %v941
      %v1670 = vpop.f32.mrf.mxu0
      %v1671 = vadd.f32 %v1606, %v1670
      %1672 = vdwg.mxu0
      %v1673 = vadd.f32 %v1382, %v1626
      %v1674 = vadd.f32 %v1385, %v1629
      %v1675 = vadd.f32 %v1388, %v1632
      %v1676 = vadd.f32 %v1391, %v1635
      %v1677 = vadd.f32 %v1394, %v1638
      %v1678 = vadd.f32 %v1397, %v1641
      %v1679 = vadd.f32 %v1400, %v1644
      %v1680 = vadd.f32 %v1403, %v1647
      %v1681 = vadd.f32 %v1406, %v1650
      %v1682 = vadd.f32 %v1409, %v1653
      %v1683 = vadd.f32 %v1412, %v1656
      %v1684 = vadd.f32 %v1415, %v1659
      %v1685 = vadd.f32 %v1418, %v1662
      %v1686 = vadd.f32 %v1421, %v1665
      %v1687 = vadd.f32 %v1424, %v1668
      %v1688 = vadd.f32 %v1427, %v1671
      %v1689 = vld [vmem:[%s7] sm:$0x1]
      %v1691 = vperm.slane %v1689, 0
      %v1693 = vadd.f32 %v1673, %v1691
      %v1694 = vadd.f32 %v1674, %v1691
      %v1695 = vadd.f32 %v1675, %v1691
      %v1696 = vadd.f32 %v1676, %v1691
      %v1697 = vadd.f32 %v1677, %v1691
      %v1698 = vadd.f32 %v1678, %v1691
      %v1699 = vadd.f32 %v1679, %v1691
      %v1700 = vadd.f32 %v1680, %v1691
      %v1701 = vadd.f32 %v1681, %v1691
      %v1702 = vadd.f32 %v1682, %v1691
      %v1703 = vadd.f32 %v1683, %v1691
      %v1704 = vadd.f32 %v1684, %v1691
      %v1705 = vadd.f32 %v1685, %v1691
      %v1706 = vadd.f32 %v1686, %v1691
      %v1707 = vadd.f32 %v1687, %v1691
      %v1708 = vadd.f32 %v1688, %v1691
      %v1709 = vmax.f32 %v1693, 0.0
      %v1710 = vmax.f32 %v1694, 0.0
      %v1711 = vmax.f32 %v1695, 0.0
      %v1712 = vmax.f32 %v1696, 0.0
      %v1713 = vmax.f32 %v1697, 0.0
      %v1714 = vmax.f32 %v1698, 0.0
      %v1715 = vmax.f32 %v1699, 0.0
      %v1716 = vmax.f32 %v1700, 0.0
      %v1717 = vmax.f32 %v1701, 0.0
      %v1718 = vmax.f32 %v1702, 0.0
      %v1719 = vmax.f32 %v1703, 0.0
      %v1720 = vmax.f32 %v1704, 0.0
      %v1721 = vmax.f32 %v1705, 0.0
      %v1722 = vmax.f32 %v1706, 0.0
      %v1723 = vmax.f32 %v1707, 0.0
      %v1724 = vmax.f32 %v1708, 0.0
      %v1725 = vld [vmem:[%s8] sm:$0xff]
      %v1726 = vld [vmem:[%s8 + $0x8] sm:$0xff]
      %v1727 = vld [vmem:[%s8 + $0x10] sm:$0xff]
      %v1728 = vld [vmem:[%s8 + $0x18] sm:$0xff]
      %v1729 = vld [vmem:[%s8 + $0x20] sm:$0xff]
      %v1730 = vld [vmem:[%s8 + $0x28] sm:$0xff]
      %v1731 = vld [vmem:[%s8 + $0x30] sm:$0xff]
      %v1732 = vld [vmem:[%s8 + $0x38] sm:$0xff]
      %v1733 = vld [vmem:[%s8 + $0x40] sm:$0xff]
      %v1734 = vld [vmem:[%s8 + $0x48] sm:$0xff]
      %v1735 = vld [vmem:[%s8 + $0x50] sm:$0xff]
      %v1736 = vld [vmem:[%s8 + $0x58] sm:$0xff]
      %v1737 = vld [vmem:[%s8 + $0x60] sm:$0xff]
      %v1738 = vld [vmem:[%s8 + $0x68] sm:$0xff]
      %v1739 = vld [vmem:[%s8 + $0x70] sm:$0xff]
      %v1740 = vld [vmem:[%s8 + $0x78] sm:$0xff]
      %v1741 = vld [vmem:[%s9] sm:$0x1]
      %v1743 = vperm.slane %v1741, 0
      %1745 = vmatpush.msra.mxu0 %v1740
      %1746 = vmatpush.msra.mxu0 %v1739
      %1747 = vmatpush.msra.mxu0 %v1738
      %1748 = vmatpush.msra.mxu0 %v1737
      %1749 = vmatpush.msra.mxu0 %v1736
      %1750 = vmatpush.msra.mxu0 %v1735
      %1751 = vmatpush.msra.mxu0 %v1734
      %1752 = vmatpush.msra.mxu0 %v1733
      %1753 = vmatpush.msra.mxu0 %v1732
      %1754 = vmatpush.msra.mxu0 %v1731
      %1755 = vmatpush.msra.mxu0 %v1730
      %1756 = vmatpush.msra.mxu0 %v1729
      %1757 = vmatpush.msra.mxu0 %v1728
      %1758 = vmatpush.msra.mxu0 %v1727
      %1759 = vmatpush.msra.mxu0 %v1726
      %1760 = vmatpush.msra.mxu0 %v1725
      %1761 = vmatmul.f32.gmra.mxu0 %v1709
      %v1762 = vpop.f32.mrf.mxu0
      %v1763 = vadd.f32 %v1743, %v1762
      %1764 = vmatmul.f32.gmra.mxu0 %v1710
      %v1765 = vpop.f32.mrf.mxu0
      %v1766 = vadd.f32 %v1743, %v1765
      %1767 = vmatmul.f32.gmra.mxu0 %v1711
      %v1768 = vpop.f32.mrf.mxu0
      %v1769 = vadd.f32 %v1743, %v1768
      %1770 = vmatmul.f32.gmra.mxu0 %v1712
      %v1771 = vpop.f32.mrf.mxu0
      %v1772 = vadd.f32 %v1743, %v1771
      %1773 = vmatmul.f32.gmra.mxu0 %v1713
      %v1774 = vpop.f32.mrf.mxu0
      %v1775 = vadd.f32 %v1743, %v1774
      %1776 = vmatmul.f32.gmra.mxu0 %v1714
      %v1777 = vpop.f32.mrf.mxu0
      %v1778 = vadd.f32 %v1743, %v1777
      %1779 = vmatmul.f32.gmra.mxu0 %v1715
      %v1780 = vpop.f32.mrf.mxu0
      %v1781 = vadd.f32 %v1743, %v1780
      %1782 = vmatmul.f32.gmra.mxu0 %v1716
      %v1783 = vpop.f32.mrf.mxu0
      %v1784 = vadd.f32 %v1743, %v1783
      %1785 = vmatmul.f32.gmra.mxu0 %v1717
      %v1786 = vpop.f32.mrf.mxu0
      %v1787 = vadd.f32 %v1743, %v1786
      %1788 = vmatmul.f32.gmra.mxu0 %v1718
      %v1789 = vpop.f32.mrf.mxu0
      %v1790 = vadd.f32 %v1743, %v1789
      %1791 = vmatmul.f32.gmra.mxu0 %v1719
      %v1792 = vpop.f32.mrf.mxu0
      %v1793 = vadd.f32 %v1743, %v1792
      %1794 = vmatmul.f32.gmra.mxu0 %v1720
      %v1795 = vpop.f32.mrf.mxu0
      %v1796 = vadd.f32 %v1743, %v1795
      %1797 = vmatmul.f32.gmra.mxu0 %v1721
      %v1798 = vpop.f32.mrf.mxu0
      %v1799 = vadd.f32 %v1743, %v1798
      %1800 = vmatmul.f32.gmra.mxu0 %v1722
      %v1801 = vpop.f32.mrf.mxu0
      %v1802 = vadd.f32 %v1743, %v1801
      %1803 = vmatmul.f32.gmra.mxu0 %v1723
      %v1804 = vpop.f32.mrf.mxu0
      %v1805 = vadd.f32 %v1743, %v1804
      %1806 = vmatmul.f32.gmra.mxu0 %v1724
      %v1807 = vpop.f32.mrf.mxu0
      %v1808 = vadd.f32 %v1743, %v1807
      %1809 = vdwg.mxu0
      %v1810 = vmax.f32 %v1763, 0.0
      %v1811 = vmax.f32 %v1766, 0.0
      %v1812 = vmax.f32 %v1769, 0.0
      %v1813 = vmax.f32 %v1772, 0.0
      %v1814 = vmax.f32 %v1775, 0.0
      %v1815 = vmax.f32 %v1778, 0.0
      %v1816 = vmax.f32 %v1781, 0.0
      %v1817 = vmax.f32 %v1784, 0.0
      %v1818 = vmax.f32 %v1787, 0.0
      %v1819 = vmax.f32 %v1790, 0.0
      %v1820 = vmax.f32 %v1793, 0.0
      %v1821 = vmax.f32 %v1796, 0.0
      %v1822 = vmax.f32 %v1799, 0.0
      %v1823 = vmax.f32 %v1802, 0.0
      %v1824 = vmax.f32 %v1805, 0.0
      %v1825 = vmax.f32 %v1808, 0.0
      %v1826 = vadd.f32 %v1810, %v593
      %v1827 = vadd.f32 %v1811, %v594
      %v1828 = vadd.f32 %v1812, %v595
      %v1829 = vadd.f32 %v1813, %v596
      %v1830 = vadd.f32 %v1814, %v597
      %v1831 = vadd.f32 %v1815, %v598
      %v1832 = vadd.f32 %v1816, %v599
      %v1833 = vadd.f32 %v1817, %v600
      %v1834 = vadd.f32 %v1818, %v601
      %v1835 = vadd.f32 %v1819, %v602
      %v1836 = vadd.f32 %v1820, %v603
      %v1837 = vadd.f32 %v1821, %v604
      %v1838 = vadd.f32 %v1822, %v605
      %v1839 = vadd.f32 %v1823, %v606
      %v1840 = vadd.f32 %v1824, %v607
      %v1841 = vadd.f32 %v1825, %v608
      %v1842 = vld [vmem:[%s10] sm:$0xff]
      %v1843 = vld [vmem:[%s10 + $0x8] sm:$0xff]
      %v1844 = vld [vmem:[%s10 + $0x10] sm:$0xff]
      %v1845 = vld [vmem:[%s10 + $0x18] sm:$0xff]
      %v1846 = vld [vmem:[%s10 + $0x20] sm:$0xff]
      %v1847 = vld [vmem:[%s10 + $0x28] sm:$0xff]
      %v1848 = vld [vmem:[%s10 + $0x30] sm:$0xff]
      %v1849 = vld [vmem:[%s10 + $0x38] sm:$0xff]
      %v1850 = vld [vmem:[%s10 + $0x40] sm:$0xff]
      %v1851 = vld [vmem:[%s10 + $0x48] sm:$0xff]
      %v1852 = vld [vmem:[%s10 + $0x50] sm:$0xff]
      %v1853 = vld [vmem:[%s10 + $0x58] sm:$0xff]
      %v1854 = vld [vmem:[%s10 + $0x60] sm:$0xff]
      %v1855 = vld [vmem:[%s10 + $0x68] sm:$0xff]
      %v1856 = vld [vmem:[%s10 + $0x70] sm:$0xff]
      %v1857 = vld [vmem:[%s10 + $0x78] sm:$0xff]
      %v1858 = vld [vmem:[%s11] sm:$0x1]
      %v1860 = vperm.slane %v1858, 0
      %1862 = vmatpush.msra.mxu0 %v1857
      %1863 = vmatpush.msra.mxu0 %v1856
      %1864 = vmatpush.msra.mxu0 %v1855
      %1865 = vmatpush.msra.mxu0 %v1854
      %1866 = vmatpush.msra.mxu0 %v1853
      %1867 = vmatpush.msra.mxu0 %v1852
      %1868 = vmatpush.msra.mxu0 %v1851
      %1869 = vmatpush.msra.mxu0 %v1850
      %1870 = vmatpush.msra.mxu0 %v1849
      %1871 = vmatpush.msra.mxu0 %v1848
      %1872 = vmatpush.msra.mxu0 %v1847
      %1873 = vmatpush.msra.mxu0 %v1846
      %1874 = vmatpush.msra.mxu0 %v1845
      %1875 = vmatpush.msra.mxu0 %v1844
      %1876 = vmatpush.msra.mxu0 %v1843
      %1877 = vmatpush.msra.mxu0 %v1842
      %1878 = vmatmul.f32.gmra.mxu0 %v1826
      %v1879 = vpop.f32.mrf.mxu0
      %v1880 = vadd.f32 %v1860, %v1879
      %1881 = vmatmul.f32.gmra.mxu0 %v1827
      %v1882 = vpop.f32.mrf.mxu0
      %v1883 = vadd.f32 %v1860, %v1882
      %1884 = vmatmul.f32.gmra.mxu0 %v1828
      %v1885 = vpop.f32.mrf.mxu0
      %v1886 = vadd.f32 %v1860, %v1885
      %1887 = vmatmul.f32.gmra.mxu0 %v1829
      %v1888 = vpop.f32.mrf.mxu0
      %v1889 = vadd.f32 %v1860, %v1888
      %1890 = vmatmul.f32.gmra.mxu0 %v1830
      %v1891 = vpop.f32.mrf.mxu0
      %v1892 = vadd.f32 %v1860, %v1891
      %1893 = vmatmul.f32.gmra.mxu0 %v1831
      %v1894 = vpop.f32.mrf.mxu0
      %v1895 = vadd.f32 %v1860, %v1894
      %1896 = vmatmul.f32.gmra.mxu0 %v1832
      %v1897 = vpop.f32.mrf.mxu0
      %v1898 = vadd.f32 %v1860, %v1897
      %1899 = vmatmul.f32.gmra.mxu0 %v1833
      %v1900 = vpop.f32.mrf.mxu0
      %v1901 = vadd.f32 %v1860, %v1900
      %1902 = vmatmul.f32.gmra.mxu0 %v1834
      %v1903 = vpop.f32.mrf.mxu0
      %v1904 = vadd.f32 %v1860, %v1903
      %1905 = vmatmul.f32.gmra.mxu0 %v1835
      %v1906 = vpop.f32.mrf.mxu0
      %v1907 = vadd.f32 %v1860, %v1906
      %1908 = vmatmul.f32.gmra.mxu0 %v1836
      %v1909 = vpop.f32.mrf.mxu0
      %v1910 = vadd.f32 %v1860, %v1909
      %1911 = vmatmul.f32.gmra.mxu0 %v1837
      %v1912 = vpop.f32.mrf.mxu0
      %v1913 = vadd.f32 %v1860, %v1912
      %1914 = vmatmul.f32.gmra.mxu0 %v1838
      %v1915 = vpop.f32.mrf.mxu0
      %v1916 = vadd.f32 %v1860, %v1915
      %1917 = vmatmul.f32.gmra.mxu0 %v1839
      %v1918 = vpop.f32.mrf.mxu0
      %v1919 = vadd.f32 %v1860, %v1918
      %1920 = vmatmul.f32.gmra.mxu0 %v1840
      %v1921 = vpop.f32.mrf.mxu0
      %v1922 = vadd.f32 %v1860, %v1921
      %1923 = vmatmul.f32.gmra.mxu0 %v1841
      %v1924 = vpop.f32.mrf.mxu0
      %v1925 = vadd.f32 %v1860, %v1924
      %1926 = vdwg.mxu0
      %v1927 = vmax.f32 %v1880, 0.0
      %v1928 = vmax.f32 %v1883, 0.0
      %v1929 = vmax.f32 %v1886, 0.0
      %v1930 = vmax.f32 %v1889, 0.0
      %v1931 = vmax.f32 %v1892, 0.0
      %v1932 = vmax.f32 %v1895, 0.0
      %v1933 = vmax.f32 %v1898, 0.0
      %v1934 = vmax.f32 %v1901, 0.0
      %v1935 = vmax.f32 %v1904, 0.0
      %v1936 = vmax.f32 %v1907, 0.0
      %v1937 = vmax.f32 %v1910, 0.0
      %v1938 = vmax.f32 %v1913, 0.0
      %v1939 = vmax.f32 %v1916, 0.0
      %v1940 = vmax.f32 %v1919, 0.0
      %v1941 = vmax.f32 %v1922, 0.0
      %v1942 = vmax.f32 %v1925, 0.0
      %vm1943 = vcmask 64512
      %1944 = vst.msk [vmem:[%s443] sm:$0xff] %vm1943, %v1927
      %1945 = vst.msk [vmem:[%s443 + $0x8] sm:$0xff] %vm1943, %v1928
      %1946 = vst.msk [vmem:[%s443 + $0x10] sm:$0xff] %vm1943, %v1929
      %1947 = vst.msk [vmem:[%s443 + $0x18] sm:$0xff] %vm1943, %v1930
      %1948 = vst.msk [vmem:[%s443 + $0x20] sm:$0xff] %vm1943, %v1931
      %1949 = vst.msk [vmem:[%s443 + $0x28] sm:$0xff] %vm1943, %v1932
      %1950 = vst.msk [vmem:[%s443 + $0x30] sm:$0xff] %vm1943, %v1933
      %1951 = vst.msk [vmem:[%s443 + $0x38] sm:$0xff] %vm1943, %v1934
      %1952 = vst.msk [vmem:[%s443 + $0x40] sm:$0xff] %vm1943, %v1935
      %1953 = vst.msk [vmem:[%s443 + $0x48] sm:$0xff] %vm1943, %v1936
      %1954 = vst.msk [vmem:[%s443 + $0x50] sm:$0xff] %vm1943, %v1937
      %1955 = vst.msk [vmem:[%s443 + $0x58] sm:$0xff] %vm1943, %v1938
      %1956 = vst.msk [vmem:[%s443 + $0x60] sm:$0xff] %vm1943, %v1939
      %1957 = vst.msk [vmem:[%s443 + $0x68] sm:$0xff] %vm1943, %v1940
      %1958 = vst.msk [vmem:[%s443 + $0x70] sm:$0xff] %vm1943, %v1941
      %1959 = vst.msk [vmem:[%s443 + $0x78] sm:$0xff] %vm1943, %v1942
      %s1960 = smul.u32 8, %s28
      %p1961 = scmp.lt.s32.totalorder %s27, 1
      %s1962 = scalar_select %p1961, %s27, 1
      %p1963 = scmp.lt.s32.totalorder %s1960, 15
      %s1964 = scalar_select %p1963, %s1960, 15
      %s1965 = smul.addr %s1964, 2
      %s1966 = smul.addr %s1962, 32
      %s1967 = sadd.s32 %s1965, %s1966
      %s1968 = smul.addr %s1967, 8
      %s1969 = scalar_lea.vmem %s12, %s1968
      // Predicated region
      $region137: #{res_correction_forward_nhwc.1} parent=59 // pred_check
        %p1970 = pneg %p279
      $region138: #{res_correction_forward_nhwc.1} parent=59 // pred_check_branch
        %1972 = sbr.rel (%p1970) target = $region140
      $region139: #{res_correction_forward_nhwc.1} parent=59 // pred_region
        %s1973 = smul.u32 8, %s28
      $region140: #{res_correction_forward_nhwc.1} parent=59 // pred_fallthru
        _
    $region60: #{res_correction_forward_nhwc.1} parent=5 // pred_fallthru
      _
    %p1974 = scmp.le.s32.totalorder 2, %s18
    // Predicated region
    $region141: #{res_correction_forward_nhwc.1} parent=5 // pred_check
      %p1975 = pneg %p1974
    $region142: #{res_correction_forward_nhwc.1} parent=5 // pred_check_branch
      %1977 = sbr.rel (%p1975) target = $region144
    $region143: #{res_correction_forward_nhwc.1} parent=5 // pred_region
      %s1978 = ssub.s32 %s18, 2
      // Predicated region
      $region145: #{res_correction_forward_nhwc.1} parent=143 // pred_check
        %p1979 = pneg %p285
      $region146: #{res_correction_forward_nhwc.1} parent=143 // pred_check_branch
        %1981 = sbr.rel (%p1979) target = $region148
      $region147: #{res_correction_forward_nhwc.1} parent=143 // pred_region
        %s1982 = smul.u32 8, %s30
        %p1983 = scmp.lt.s32.totalorder %s29, 1
        %s1984 = scalar_select %p1983, %s29, 1
        %p1985 = scmp.lt.s32.totalorder %s1982, 15
        %s1986 = scalar_select %p1985, %s1982, 15
        %s1987 = smul.addr %s1986, 2
        %s1988 = smul.addr %s1984, 32
        %s1989 = sadd.s32 %s1987, %s1988
        %s1990 = smul.addr %s1989, 8
        %s1991 = scalar_lea.vmem %s12, %s1990
      $region148: #{res_correction_forward_nhwc.1} parent=143 // pred_fallthru
        _
    $region144: #{res_correction_forward_nhwc.1} parent=5 // pred_fallthru
      _
  $region6: #{res_correction_forward_nhwc.1} parent=0 // loop_footer
    %s22 = sadd.s32 1, %s18
  $region7: #{res_correction_forward_nhwc.1} parent=0 // loop_footer_branch
    %17 = sbr.rel target = $region3
  $region8: #{res_correction_forward_nhwc.1} parent=0 // loop_exit
    _
  %1992 = vsyncmov [#allocation6]
  %s1993 = vpop.sfrf %1992
  %p1994 = scmp.eq.s32.totalorder %s1993, 0
  %p1995 = pneg %p1994
  %1997 = shalt.err (%p1995)
  %s1998 = scalar_lea.sflag [#allocation6], 1
  %1999 = vsyncmov %s1998
  %s2000 = vpop.sfrf %1999
  %p2001 = scmp.eq.s32.totalorder %s2000, 0
  %p2002 = pneg %p2001
  %2004 = shalt.err (%p2002)
  %s2005 = scalar_lea.sflag [#allocation6], 2
  %2006 = vsyncmov %s2005
  %s2007 = vpop.sfrf %2006
  %p2008 = scmp.eq.s32.totalorder %s2007, 0
  %p2009 = pneg %p2008
  %2011 = shalt.err (%p2009)
  %s2012 = scalar_lea.sflag [#allocation6], 3
  %2013 = vsyncmov %s2012
  %s2014 = vpop.sfrf %2013
  %p2015 = scmp.eq.s32.totalorder %s2014, 0
  %p2016 = pneg %p2015
  %2018 = shalt.err (%p2016)

</llo_original>
